<compile_context>
chip_gen: v7x
topology: tpu7x:2x2x1
jax: 0.10.0
libtpu: 0.0.40
codegen_flags: <defaults>
</compile_context>

<pallas_src>
import jax
import jax.numpy as jnp
from jax.experimental import pallas as pl
from jax.experimental.pallas import tpu as pltpu


_LANES = 1024           # fixed wide lane dim -> unmasked vst, single compile
_BLOCK_ROWS = 512       # (512, 1024) f32 tile = 2 MiB; 4 live buffers = 8 MiB
_TINY_THRESHOLD = 64 * 1024  # below this, skip Pallas entirely


def linear_kernel(w_ref, b_ref, x_ref, o_ref):
    # w_ref / b_ref: (1,) f32 in SMEM (scalar path).
    # x_ref / o_ref: (_BLOCK_ROWS, _LANES) f32 lane-dense VMEM tiles.
    # y = x * w + b  — a single VPU FMA over the whole tile.
    o_ref[...] = x_ref[...] * w_ref[0] + b_ref[0]


def _linear_pallas_flat(x_flat, w_s, b_s):
    """Large-N path: x_flat is a flat f32 vector; returns flat y = x*w + b."""
    n = x_flat.shape[0]

    # Pad only to a multiple of 8*lanes (keeps the row count a multiple of 8
    # for clean (8,128) sub-tiling); the final grid block may be partial in
    # the row dimension — Pallas masks the out-of-bounds writeback.
    row_quantum = 8 * _LANES
    n_pad = pl.cdiv(n, row_quantum) * row_quantum
    xf = jnp.pad(x_flat, (0, n_pad - n))
    rows = n_pad // _LANES
    x2d = xf.reshape(rows, _LANES)          # contiguous -> layout-free reshape

    grid = (pl.cdiv(rows, _BLOCK_ROWS),)

    out2d = pl.pallas_call(
        linear_kernel,
        out_shape=jax.ShapeDtypeStruct((rows, _LANES), jnp.float32),
        grid_spec=pl.GridSpec(
            grid=grid,
            in_specs=[
                pl.BlockSpec(memory_space=pltpu.MemorySpace.SMEM),   # weight scalar
                pl.BlockSpec(memory_space=pltpu.MemorySpace.SMEM),   # bias scalar
                pl.BlockSpec((_BLOCK_ROWS, _LANES), lambda i: (i, 0)),
            ],
            out_specs=pl.BlockSpec((_BLOCK_ROWS, _LANES), lambda i: (i, 0)),
        ),
        compiler_params=pltpu.CompilerParams(
            dimension_semantics=("parallel",),       # shards across v7x's 2 TCs
            vmem_limit_bytes=32 * 1024 * 1024,       # headroom on v5e's 16 MiB default
        ),
        cost_estimate=pl.CostEstimate(
            flops=2 * n_pad, transcendentals=0, bytes_accessed=8 * n_pad),
    )(w_s, b_s, x2d)

    return out2d.reshape(-1)[:n]


def linear_forward(x, weight, bias):
    """nn.Linear(1, 1) forward.

    x: (N, 1) f32, weight: (1, 1) f32, bias: (1,) f32  ->  (N, 1) f32
    """
    n, in_dim = x.shape
    out_dim = weight.shape[0]
    assert in_dim == 1 and out_dim == 1, "kernel specialized to nn.Linear(1, 1)"

    x = x.astype(jnp.float32)
    w_s = weight.reshape(1).astype(jnp.float32)
    b_s = bias.reshape(1).astype(jnp.float32)

    if n < _TINY_THRESHOLD:
        # Tiny batch: launch/pipeline overhead would dominate; let XLA fuse it.
        return (x * w_s[0] + b_s[0]).reshape(n, out_dim)

    return _linear_pallas_flat(x.reshape(-1), w_s, b_s).reshape(n, out_dim)


if __name__ == "__main__":
    input_dim = 1
    output_dim = 1

    # Deterministic parameter init (mimics nn.Linear uniform(-1/sqrt(in), 1/sqrt(in))).
    key = jax.random.PRNGKey(0)
    kw, kb, kx = jax.random.split(key, 3)
    bound = 1.0 / (input_dim ** 0.5)
    weight = jax.random.uniform(kw, (output_dim, input_dim), jnp.float32, -bound, bound)
    bias = jax.random.uniform(kb, (output_dim,), jnp.float32, -bound, bound)

    # 1) Same tiny data as the PyTorch script (takes the fused XLA fast path).
    x_small = jnp.array([1, 2, 0.5, 2.5, 2.6, 3.1], dtype=jnp.float32).reshape(-1, 1)
    out_small = jax.block_until_ready(linear_forward(x_small, weight, bias))
    ref_small = x_small @ weight.T + bias
    assert out_small.shape == (6, 1), out_small.shape
    assert jnp.allclose(out_small, ref_small, atol=1e-6), (out_small, ref_small)

    # 2) Larger batch to exercise the Pallas path (grid of 3 steps, last block
    #    partial in the row dimension).
    n_large = 1_300_000
    x_large = jax.random.normal(kx, (n_large, 1), jnp.float32)
    out_large = jax.block_until_ready(linear_forward(x_large, weight, bias))
    ref_large = x_large @ weight.T + bias
    assert out_large.shape == (n_large, 1), out_large.shape
    assert jnp.allclose(out_large, ref_large, atol=1e-5), "large-N mismatch"

    print("KERNEL_OK")
</pallas_src>

<mosaic_0001>
module attributes {stable_mosaic.version = 11 : i64} {
  func.func @linear_kernel(%arg0: i32, %arg1: memref<1xf32, #tpu.memory_space<smem>>, %arg2: memref<1xf32, #tpu.memory_space<smem>>, %arg3: memref<512x1024xf32, #tpu.memory_space<vmem>>, %arg4: memref<512x1024xf32, #tpu.memory_space<vmem>>) attributes {dimension_semantics = [#tpu.dimension_semantics<parallel>], iteration_bounds = array<i64: 3>, scalar_prefetch = 0 : i64, scratch_operands = 0 : i64, tpu.core_type = #tpu.core_type<tc>, window_params = [{transform_indices = @transform_0, window_bounds = array<i64: 1>}, {transform_indices = @transform_1, window_bounds = array<i64: 1>}, {transform_indices = @transform_2, window_bounds = array<i64: 512, 1024>}, {transform_indices = @transform_3, window_bounds = array<i64: 512, 1024>}]} {
    %c0 = arith.constant 0 : index
    %c0_0 = arith.constant 0 : index
    %0 = vector.load %arg3[%c0, %c0_0] : memref<512x1024xf32, #tpu.memory_space<vmem>>, vector<512x1024xf32>
    %c0_1 = arith.constant 0 : index
    %1 = memref.load %arg1[%c0_1] : memref<1xf32, #tpu.memory_space<smem>>
    %2 = vector.broadcast %1 : f32 to vector<512x1024xf32>
    %3 = arith.mulf %0, %2 : vector<512x1024xf32>
    %c0_2 = arith.constant 0 : index
    %4 = memref.load %arg2[%c0_2] : memref<1xf32, #tpu.memory_space<smem>>
    %5 = vector.broadcast %4 : f32 to vector<512x1024xf32>
    %6 = arith.addf %3, %5 : vector<512x1024xf32>
    %c0_3 = arith.constant 0 : index
    %c0_4 = arith.constant 0 : index
    %7 = vector.load %arg4[%c0_3, %c0_4] : memref<512x1024xf32, #tpu.memory_space<vmem>>, vector<512x1024xf32>
    tpu.vector_store %arg4[%c0_3, %c0_4], %6 {strides = array<i32>} : memref<512x1024xf32, #tpu.memory_space<vmem>>, vector<512x1024xf32>,
    return
  }
  func.func @transform_0(%arg0: i32) -> i32 {
    %c0_i32 = arith.constant 0 : i32
    %c0_i32_0 = arith.constant 0 : i32
    return %c0_i32 : i32
  }
  func.func @transform_1(%arg0: i32) -> i32 {
    %c0_i32 = arith.constant 0 : i32
    %c0_i32_0 = arith.constant 0 : i32
    return %c0_i32 : i32
  }
  func.func @transform_2(%arg0: i32) -> (i32, i32) {
    %c0_i32 = arith.constant 0 : i32
    %c0_i32_0 = arith.constant 0 : i32
    return %arg0, %c0_i32 : i32, i32
  }
  func.func @transform_3(%arg0: i32) -> (i32, i32) {
    %c0_i32 = arith.constant 0 : i32
    %c0_i32_0 = arith.constant 0 : i32
    return %arg0, %c0_i32 : i32, i32
  }
}

</mosaic_0001>

<llo_original>
// kernel: tpu_custom_call.1
$region0: #{tpu_custom_call.1}
  #allocation0 [shape = 'u32[]', space=smem, size = 0x4, offset = 0x4, fixed_abs, tag = 'smem constant byte address 0x4 - core index']
  #allocation1 [shape = 'u32[144,128]{1,0:T(1,128)}', space=vmem, size = 0x12000, scoped, tag = 'internal scratch']
  #allocation2 [shape = 'f32[1]{0:T(128)S(6)}', space=smem, size = 0x200, scoped, tag = 'scoped memory for tpu_custom_call.1']
  #allocation3 [shape = 'f32[1]{0:T(128)S(6)}', space=smem, size = 0x200, scoped, tag = 'scoped memory for tpu_custom_call.1']
  %s0 = inlined_call_operand.<no memory space> [shape: f32[1], index: 0, kind: input, shape index: {}]
  %s1 = inlined_call_operand.<no memory space> [shape: f32[1], index: 1, kind: input, shape index: {}]
  %s2 = inlined_call_operand.hbm [shape: f32[1272,1024], index: 2, kind: input, shape index: {}]
  %s3 = inlined_call_operand.hbm [shape: f32[1272,1024], index: 3, kind: output, shape index: {}]
  %s4 = sld [smem:[#allocation0]]
  $region49: #{tpu_custom_call.1} parent=0
    _
  %s6 = ssub.s32 1, %s4
  %s7 = scalar_select 0, %s6, %s4
  %8 = sst [smem:[#allocation2]] %s0
  %9 = sst [smem:[#allocation3]] %s1
  $region1: #{tpu_custom_call.1} parent=0
    #allocation4 [shape = 'u8[4194304]{0}', space=vmem, size = 0x400000, scoped, tag = 'input window, operand 2']
    #allocation5 [shape = 's32[2]{0}', space=sflag, size = 0x8, scoped, tag = 'scoped memory for tpu_custom_call.1']
    #allocation6 [shape = 's32[2]{0}', space=sflag, size = 0x8, scoped, tag = 'scoped memory for tpu_custom_call.1']
    #allocation7 [shape = 'u8[4194304]{0}', space=vmem, size = 0x400000, scoped, tag = 'output window, operand 0']
    %10 = vsyncpa [#allocation5], 0
    %s11 = scalar_lea.sflag [#allocation5], 1
    %12 = vsyncpa %s11, 0
    %13 = vsyncpa [#allocation6], 0
    %s14 = scalar_lea.sflag [#allocation6], 1
    %15 = vsyncpa %s14, 0
    loop: start=0, step=1, limit=5
    $region2: #{tpu_custom_call.1} parent=1 // loop_pre_header
      _
    $region3: #{tpu_custom_call.1} parent=1 // loop_header
      %s17 = sphi 0, %s21
      %p18 = scmp.ge.s32.totalorder %s17, 5
      %s25 = sphi 0, %s25
      %s27 = sphi 0, %s25
      %s28 = sphi 0, %s27
      %s42 = sphi 0, %s28
      %s46 = sphi 0, %s46
      %s48 = sphi 0, %s46
      %s49 = sphi 0, %s48
      %s63 = sphi 0, %s49
      %s69 = sphi 0, %s71
      %s72 = sphi 0, %s69
      %s73 = sphi 0, %s72
      %s89 = sphi 0, %s73
      %s95 = sphi 0, %s97
      %s98 = sphi 0, %s95
      %s99 = sphi 0, %s98
      %s115 = sphi 0, %s99
    $region4: #{tpu_custom_call.1} parent=1 // loop_header_branch
      %20 = sbr.rel (%p18) target = $region8
    $region5: #{tpu_custom_call.1} parent=1 // loop_body
      %s22 = ssub.s32 %s17, 1
      %s23 = ssub.s32 %s17, 2
      %s24 = sadd.s32 %s17, 1
      %s26 = sadd.s32 %s25, 1
      %p29 = scmp.eq.s32.totalorder %s17, 2
      %p30 = scmp.ne.s32.totalorder %s25, %s27
      %p31 = scmp.eq.s32.totalorder %s17, 0
      %p32 = por %p30, %p31
      %p33 = scmp.ne.s32.totalorder %s25, %s27
      %p34 = scmp.eq.s32.totalorder %s22, 2
      %p35 = por %p33, %p34
      %p36 = scmp.ne.s32.totalorder %s27, %s28
      %p37 = scmp.eq.s32.totalorder %s22, 0
      %p38 = por %p36, %p37
      %p39 = scmp.ne.s32.totalorder %s27, %s28
      %p40 = scmp.eq.s32.totalorder %s23, 2
      %p41 = por %p39, %p40
      %p43 = scmp.ne.s32.totalorder %s28, %s42
      %p44 = scmp.eq.s32.totalorder %s23, 0
      %p45 = por %p43, %p44
      %s47 = sadd.s32 %s46, 1
      %p50 = scmp.eq.s32.totalorder %s17, 2
      %p51 = scmp.ne.s32.totalorder %s46, %s48
      %p52 = scmp.eq.s32.totalorder %s17, 0
      %p53 = por %p51, %p52
      %p54 = scmp.ne.s32.totalorder %s46, %s48
      %p55 = scmp.eq.s32.totalorder %s22, 2
      %p56 = por %p54, %p55
      %p57 = scmp.ne.s32.totalorder %s48, %s49
      %p58 = scmp.eq.s32.totalorder %s22, 0
      %p59 = por %p57, %p58
      %p60 = scmp.ne.s32.totalorder %s48, %s49
      %p61 = scmp.eq.s32.totalorder %s23, 2
      %p62 = por %p60, %p61
      %p64 = scmp.ne.s32.totalorder %s49, %s63
      %p65 = scmp.eq.s32.totalorder %s23, 0
      %p66 = por %p64, %p65
      %s67 = ssub.s32 %s17, %s24
      %p68 = scmp.eq.s32.totalorder %s67, 0
      %s70 = sadd.s32 %s69, 1
      %s71 = scalar_select %p68, %s69, %s70
      %p74 = pneg %p68
      %p75 = scmp.eq.s32.totalorder %s17, 2
      %p76 = por %p74, %p75
      %p77 = scmp.ne.s32.totalorder %s69, %s72
      %p78 = scmp.eq.s32.totalorder %s17, 0
      %p79 = por %p77, %p78
      %p80 = scmp.ne.s32.totalorder %s69, %s72
      %p81 = scmp.eq.s32.totalorder %s22, 2
      %p82 = por %p80, %p81
      %p83 = scmp.ne.s32.totalorder %s72, %s73
      %p84 = scmp.eq.s32.totalorder %s22, 0
      %p85 = por %p83, %p84
      %p86 = scmp.ne.s32.totalorder %s72, %s73
      %p87 = scmp.eq.s32.totalorder %s23, 2
      %p88 = por %p86, %p87
      %p90 = scmp.ne.s32.totalorder %s73, %s89
      %p91 = scmp.eq.s32.totalorder %s23, 0
      %p92 = por %p90, %p91
      %s93 = ssub.s32 %s17, %s24
      %p94 = scmp.eq.s32.totalorder %s93, 0
      %s96 = sadd.s32 %s95, 1
      %s97 = scalar_select %p94, %s95, %s96
      %p100 = pneg %p94
      %p101 = scmp.eq.s32.totalorder %s17, 2
      %p102 = por %p100, %p101
      %p103 = scmp.ne.s32.totalorder %s95, %s98
      %p104 = scmp.eq.s32.totalorder %s17, 0
      %p105 = por %p103, %p104
      %p106 = scmp.ne.s32.totalorder %s95, %s98
      %p107 = scmp.eq.s32.totalorder %s22, 2
      %p108 = por %p106, %p107
      %p109 = scmp.ne.s32.totalorder %s98, %s99
      %p110 = scmp.eq.s32.totalorder %s22, 0
      %p111 = por %p109, %p110
      %p112 = scmp.ne.s32.totalorder %s98, %s99
      %p113 = scmp.eq.s32.totalorder %s23, 2
      %p114 = por %p112, %p113
      %p116 = scmp.ne.s32.totalorder %s99, %s115
      %p117 = scmp.eq.s32.totalorder %s23, 0
      %p118 = por %p116, %p117
      %p119 = scmp.le.s32.totalorder 1, %s17
      %p120 = scmp.lt.s32.totalorder %s17, 4
      %p121 = pnand %p119, %p120
      %p122 = pneg %p121
      // Predicated region
      $region9: #{tpu_custom_call.1} parent=5 // pred_check
        _
      $region10: #{tpu_custom_call.1} parent=5 // pred_check_branch
        %124 = sbr.rel (%p121) target = $region12
      $region11: #{tpu_custom_call.1} parent=5 // pred_region
        %s125 = ssub.s32 %s17, 1
        // Predicated region
        $region13: #{tpu_custom_call.1} parent=11 // pred_check
          %p126 = pneg %p38
        $region14: #{tpu_custom_call.1} parent=11 // pred_check_branch
          %128 = sbr.rel (%p126) target = $region16
        $region15: #{tpu_custom_call.1} parent=11 // pred_region
          _
        $region16: #{tpu_custom_call.1} parent=11 // pred_fallthru
          _
        // Predicated region
        $region17: #{tpu_custom_call.1} parent=11 // pred_check
          %p129 = pneg %p59
        $region18: #{tpu_custom_call.1} parent=11 // pred_check_branch
          %131 = sbr.rel (%p129) target = $region20
        $region19: #{tpu_custom_call.1} parent=11 // pred_region
          _
        $region20: #{tpu_custom_call.1} parent=11 // pred_fallthru
          _
      $region12: #{tpu_custom_call.1} parent=5 // pred_fallthru
        _
      %p132 = scmp.lt.s32.totalorder %s17, 3
      // Predicated region
      $region21: #{tpu_custom_call.1} parent=5 // pred_check
        %p133 = pneg %p132
      $region22: #{tpu_custom_call.1} parent=5 // pred_check_branch
        %135 = sbr.rel (%p133) target = $region24
      $region23: #{tpu_custom_call.1} parent=5 // pred_region
        // Predicated region
        $region25: #{tpu_custom_call.1} parent=23 // pred_check
          %p136 = pneg %p79
        $region26: #{tpu_custom_call.1} parent=23 // pred_check_branch
          %138 = sbr.rel (%p136) target = $region28
        $region27: #{tpu_custom_call.1} parent=23 // pred_region
          %s139 = sand.u32 %s69, 1
          %s140 = scalar_lea.sflag [#allocation5], %s139
          %s141 = sand.u32 %s69, 1
          %s142 = smul.addr %s141, 4096
          %s143 = scalar_lea.vmem [#allocation4], %s142
          %s144 = smul.u32 64, %s17
          %s145 = ssub.s32 159, %s144
          %p146 = scmp.lt.s32.totalorder %s145, 64
          %s147 = scalar_select %p146, %s145, 64
          %s148 = smul.u32 128, %s147
          %s149 = smul.u32 %s148, 8
          %s151 = ssub.s32 65536, %s149
          %152 = vsyncadd %s140, %s151
          %p153 = scmp.ne.s32.totalorder 0, %s149
          %s154 = smul.addr %s144, 8
          %s155 = smul.addr %s154, 128
          %s156 = scalar_lea.hbm %s2, %s155
          %s157 = smul.u32 64, %s147
          %s158 = sshll.u32 %s143, 4
          %s159 = int_to_ptr.vmem [resolvable:$true] %s158
          %s160 = sshll.u32 %s157, 4
          %164 = dma.hbm_to_vmem [thread:$0]  (%p153), %s156, %s160, %s159, %s140, 1024, 1024, 64
        $region28: #{tpu_custom_call.1} parent=23 // pred_fallthru
          _
      $region24: #{tpu_custom_call.1} parent=5 // pred_fallthru
        _
      %p165 = scmp.le.s32.totalorder 1, %s17
      %p166 = scmp.lt.s32.totalorder %s17, 4
      %p167 = pnand %p165, %p166
      %p168 = pneg %p167
      // Predicated region
      $region29: #{tpu_custom_call.1} parent=5 // pred_check
        _
      $region30: #{tpu_custom_call.1} parent=5 // pred_check_branch
        %170 = sbr.rel (%p167) target = $region32
      $region31: #{tpu_custom_call.1} parent=5 // pred_region
        %s171 = ssub.s32 %s17, 1
        %s172 = sand.u32 %s72, 1
        %s173 = scalar_lea.sflag [#allocation5], %s172
        %s174 = sand.u32 %s72, 1
        %s175 = smul.addr %s174, 4096
        %s176 = scalar_lea.vmem [#allocation4], %s175
        // Predicated region
        $region33: #{tpu_custom_call.1} parent=31 // pred_check
          %p177 = pneg %p85
        $region34: #{tpu_custom_call.1} parent=31 // pred_check_branch
          %179 = sbr.rel (%p177) target = $region36
        $region35: #{tpu_custom_call.1} parent=31 // pred_region
          %180 = dma.done %s173, 65536
        $region36: #{tpu_custom_call.1} parent=31 // pred_fallthru
          _
        %p181 = pneg %p38
        %p182 = pneg %p35
        %p183 = pneg %p59
        %p184 = pneg %p56
        %s185 = sand.u32 %s72, 1
        %s186 = scalar_lea.sflag [#allocation5], %s185
        %s187 = sand.u32 %s72, 1
        %s188 = smul.addr %s187, 4096
        %s189 = scalar_lea.vmem [#allocation4], %s188
        %p190 = pneg %p85
        %p191 = pneg %p82
        %p192 = pneg %p111
        %p193 = pneg %p108
        %s194 = sand.u32 %s98, 1
        %s195 = scalar_lea.sflag [#allocation6], %s194
        %s196 = sand.u32 %s98, 1
        %s197 = smul.addr %s196, 4096
        %s198 = scalar_lea.vmem [#allocation7], %s197
        %s199 = smul.u32 64, %s22
        %s200 = ssub.s32 159, %s199
        %p201 = scmp.lt.s32.totalorder %s200, 64
        %s202 = scalar_select %p201, %s200, 64
        %s203 = smul.u32 128, %s202
        %s204 = smul.u32 %s203, 8
        %s205 = smul.u32 64, %s22
        %s206 = ssub.s32 159, %s205
        %p207 = scmp.lt.s32.totalorder %s206, 64
        %s208 = scalar_select %p207, %s206, 64
        %s209 = smul.u32 128, %s208
        %s210 = smul.u32 %s209, 8
        %v211 = vld [vmem:[%s176] sm:$0xff]
        %v212 = vld [vmem:[%s176 + $0x8] sm:$0xff]
        %v213 = vld [vmem:[%s176 + $0x10] sm:$0xff]
        %v214 = vld [vmem:[%s176 + $0x18] sm:$0xff]
        %v215 = vld [vmem:[%s176 + $0x20] sm:$0xff]
        %v216 = vld [vmem:[%s176 + $0x28] sm:$0xff]
        %v217 = vld [vmem:[%s176 + $0x30] sm:$0xff]
        %v218 = vld [vmem:[%s176 + $0x38] sm:$0xff]
        %v219 = vld [vmem:[%s176 + $0x40] sm:$0xff]
        %v220 = vld [vmem:[%s176 + $0x48] sm:$0xff]
        %v221 = vld [vmem:[%s176 + $0x50] sm:$0xff]
        %v222 = vld [vmem:[%s176 + $0x58] sm:$0xff]
        %v223 = vld [vmem:[%s176 + $0x60] sm:$0xff]
        %v224 = vld [vmem:[%s176 + $0x68] sm:$0xff]
        %v225 = vld [vmem:[%s176 + $0x70] sm:$0xff]
        %v226 = vld [vmem:[%s176 + $0x78] sm:$0xff]
        %v227 = vld [vmem:[%s176 + $0x80] sm:$0xff]
        %v228 = vld [vmem:[%s176 + $0x88] sm:$0xff]
        %v229 = vld [vmem:[%s176 + $0x90] sm:$0xff]
        %v230 = vld [vmem:[%s176 + $0x98] sm:$0xff]
        %v231 = vld [vmem:[%s176 + $0xa0] sm:$0xff]
        %v232 = vld [vmem:[%s176 + $0xa8] sm:$0xff]
        %v233 = vld [vmem:[%s176 + $0xb0] sm:$0xff]
        %v234 = vld [vmem:[%s176 + $0xb8] sm:$0xff]
        %v235 = vld [vmem:[%s176 + $0xc0] sm:$0xff]
        %v236 = vld [vmem:[%s176 + $0xc8] sm:$0xff]
        %v237 = vld [vmem:[%s176 + $0xd0] sm:$0xff]
        %v238 = vld [vmem:[%s176 + $0xd8] sm:$0xff]
        %v239 = vld [vmem:[%s176 + $0xe0] sm:$0xff]
        %v240 = vld [vmem:[%s176 + $0xe8] sm:$0xff]
        %v241 = vld [vmem:[%s176 + $0xf0] sm:$0xff]
        %v242 = vld [vmem:[%s176 + $0xf8] sm:$0xff]
        %v243 = vld [vmem:[%s176 + $0x100] sm:$0xff]
        %v244 = vld [vmem:[%s176 + $0x108] sm:$0xff]
        %v245 = vld [vmem:[%s176 + $0x110] sm:$0xff]
        %v246 = vld [vmem:[%s176 + $0x118] sm:$0xff]
        %v247 = vld [vmem:[%s176 + $0x120] sm:$0xff]
        %v248 = vld [vmem:[%s176 + $0x128] sm:$0xff]
        %v249 = vld [vmem:[%s176 + $0x130] sm:$0xff]
        %v250 = vld [vmem:[%s176 + $0x138] sm:$0xff]
        %v251 = vld [vmem:[%s176 + $0x140] sm:$0xff]
        %v252 = vld [vmem:[%s176 + $0x148] sm:$0xff]
        %v253 = vld [vmem:[%s176 + $0x150] sm:$0xff]
        %v254 = vld [vmem:[%s176 + $0x158] sm:$0xff]
        %v255 = vld [vmem:[%s176 + $0x160] sm:$0xff]
        %v256 = vld [vmem:[%s176 + $0x168] sm:$0xff]
        %v257 = vld [vmem:[%s176 + $0x170] sm:$0xff]
        %v258 = vld [vmem:[%s176 + $0x178] sm:$0xff]
        %v259 = vld [vmem:[%s176 + $0x180] sm:$0xff]
        %v260 = vld [vmem:[%s176 + $0x188] sm:$0xff]
        %v261 = vld [vmem:[%s176 + $0x190] sm:$0xff]
        %v262 = vld [vmem:[%s176 + $0x198] sm:$0xff]
        %v263 = vld [vmem:[%s176 + $0x1a0] sm:$0xff]
        %v264 = vld [vmem:[%s176 + $0x1a8] sm:$0xff]
        %v265 = vld [vmem:[%s176 + $0x1b0] sm:$0xff]
        %v266 = vld [vmem:[%s176 + $0x1b8] sm:$0xff]
        %v267 = vld [vmem:[%s176 + $0x1c0] sm:$0xff]
        %v268 = vld [vmem:[%s176 + $0x1c8] sm:$0xff]
        %v269 = vld [vmem:[%s176 + $0x1d0] sm:$0xff]
        %v270 = vld [vmem:[%s176 + $0x1d8] sm:$0xff]
        %v271 = vld [vmem:[%s176 + $0x1e0] sm:$0xff]
        %v272 = vld [vmem:[%s176 + $0x1e8] sm:$0xff]
        %v273 = vld [vmem:[%s176 + $0x1f0] sm:$0xff]
        %v274 = vld [vmem:[%s176 + $0x1f8] sm:$0xff]
        %v275 = vld [vmem:[%s176 + $0x200] sm:$0xff]
        %v276 = vld [vmem:[%s176 + $0x208] sm:$0xff]
        %v277 = vld [vmem:[%s176 + $0x210] sm:$0xff]
        %v278 = vld [vmem:[%s176 + $0x218] sm:$0xff]
        %v279 = vld [vmem:[%s176 + $0x220] sm:$0xff]
        %v280 = vld [vmem:[%s176 + $0x228] sm:$0xff]
        %v281 = vld [vmem:[%s176 + $0x230] sm:$0xff]
        %v282 = vld [vmem:[%s176 + $0x238] sm:$0xff]
        %v283 = vld [vmem:[%s176 + $0x240] sm:$0xff]
        %v284 = vld [vmem:[%s176 + $0x248] sm:$0xff]
        %v285 = vld [vmem:[%s176 + $0x250] sm:$0xff]
        %v286 = vld [vmem:[%s176 + $0x258] sm:$0xff]
        %v287 = vld [vmem:[%s176 + $0x260] sm:$0xff]
        %v288 = vld [vmem:[%s176 + $0x268] sm:$0xff]
        %v289 = vld [vmem:[%s176 + $0x270] sm:$0xff]
        %v290 = vld [vmem:[%s176 + $0x278] sm:$0xff]
        %v291 = vld [vmem:[%s176 + $0x280] sm:$0xff]
        %v292 = vld [vmem:[%s176 + $0x288] sm:$0xff]
        %v293 = vld [vmem:[%s176 + $0x290] sm:$0xff]
        %v294 = vld [vmem:[%s176 + $0x298] sm:$0xff]
        %v295 = vld [vmem:[%s176 + $0x2a0] sm:$0xff]
        %v296 = vld [vmem:[%s176 + $0x2a8] sm:$0xff]
        %v297 = vld [vmem:[%s176 + $0x2b0] sm:$0xff]
        %v298 = vld [vmem:[%s176 + $0x2b8] sm:$0xff]
        %v299 = vld [vmem:[%s176 + $0x2c0] sm:$0xff]
        %v300 = vld [vmem:[%s176 + $0x2c8] sm:$0xff]
        %v301 = vld [vmem:[%s176 + $0x2d0] sm:$0xff]
        %v302 = vld [vmem:[%s176 + $0x2d8] sm:$0xff]
        %v303 = vld [vmem:[%s176 + $0x2e0] sm:$0xff]
        %v304 = vld [vmem:[%s176 + $0x2e8] sm:$0xff]
        %v305 = vld [vmem:[%s176 + $0x2f0] sm:$0xff]
        %v306 = vld [vmem:[%s176 + $0x2f8] sm:$0xff]
        %v307 = vld [vmem:[%s176 + $0x300] sm:$0xff]
        %v308 = vld [vmem:[%s176 + $0x308] sm:$0xff]
        %v309 = vld [vmem:[%s176 + $0x310] sm:$0xff]
        %v310 = vld [vmem:[%s176 + $0x318] sm:$0xff]
        %v311 = vld [vmem:[%s176 + $0x320] sm:$0xff]
        %v312 = vld [vmem:[%s176 + $0x328] sm:$0xff]
        %v313 = vld [vmem:[%s176 + $0x330] sm:$0xff]
        %v314 = vld [vmem:[%s176 + $0x338] sm:$0xff]
        %v315 = vld [vmem:[%s176 + $0x340] sm:$0xff]
        %v316 = vld [vmem:[%s176 + $0x348] sm:$0xff]
        %v317 = vld [vmem:[%s176 + $0x350] sm:$0xff]
        %v318 = vld [vmem:[%s176 + $0x358] sm:$0xff]
        %v319 = vld [vmem:[%s176 + $0x360] sm:$0xff]
        %v320 = vld [vmem:[%s176 + $0x368] sm:$0xff]
        %v321 = vld [vmem:[%s176 + $0x370] sm:$0xff]
        %v322 = vld [vmem:[%s176 + $0x378] sm:$0xff]
        %v323 = vld [vmem:[%s176 + $0x380] sm:$0xff]
        %v324 = vld [vmem:[%s176 + $0x388] sm:$0xff]
        %v325 = vld [vmem:[%s176 + $0x390] sm:$0xff]
        %v326 = vld [vmem:[%s176 + $0x398] sm:$0xff]
        %v327 = vld [vmem:[%s176 + $0x3a0] sm:$0xff]
        %v328 = vld [vmem:[%s176 + $0x3a8] sm:$0xff]
        %v329 = vld [vmem:[%s176 + $0x3b0] sm:$0xff]
        %v330 = vld [vmem:[%s176 + $0x3b8] sm:$0xff]
        %v331 = vld [vmem:[%s176 + $0x3c0] sm:$0xff]
        %v332 = vld [vmem:[%s176 + $0x3c8] sm:$0xff]
        %v333 = vld [vmem:[%s176 + $0x3d0] sm:$0xff]
        %v334 = vld [vmem:[%s176 + $0x3d8] sm:$0xff]
        %v335 = vld [vmem:[%s176 + $0x3e0] sm:$0xff]
        %v336 = vld [vmem:[%s176 + $0x3e8] sm:$0xff]
        %v337 = vld [vmem:[%s176 + $0x3f0] sm:$0xff]
        %v338 = vld [vmem:[%s176 + $0x3f8] sm:$0xff]
        %v339 = vld [vmem:[%s176 + $0x400] sm:$0xff]
        %v340 = vld [vmem:[%s176 + $0x408] sm:$0xff]
        %v341 = vld [vmem:[%s176 + $0x410] sm:$0xff]
        %v342 = vld [vmem:[%s176 + $0x418] sm:$0xff]
        %v343 = vld [vmem:[%s176 + $0x420] sm:$0xff]
        %v344 = vld [vmem:[%s176 + $0x428] sm:$0xff]
        %v345 = vld [vmem:[%s176 + $0x430] sm:$0xff]
        %v346 = vld [vmem:[%s176 + $0x438] sm:$0xff]
        %v347 = vld [vmem:[%s176 + $0x440] sm:$0xff]
        %v348 = vld [vmem:[%s176 + $0x448] sm:$0xff]
        %v349 = vld [vmem:[%s176 + $0x450] sm:$0xff]
        %v350 = vld [vmem:[%s176 + $0x458] sm:$0xff]
        %v351 = vld [vmem:[%s176 + $0x460] sm:$0xff]
        %v352 = vld [vmem:[%s176 + $0x468] sm:$0xff]
        %v353 = vld [vmem:[%s176 + $0x470] sm:$0xff]
        %v354 = vld [vmem:[%s176 + $0x478] sm:$0xff]
        %v355 = vld [vmem:[%s176 + $0x480] sm:$0xff]
        %v356 = vld [vmem:[%s176 + $0x488] sm:$0xff]
        %v357 = vld [vmem:[%s176 + $0x490] sm:$0xff]
        %v358 = vld [vmem:[%s176 + $0x498] sm:$0xff]
        %v359 = vld [vmem:[%s176 + $0x4a0] sm:$0xff]
        %v360 = vld [vmem:[%s176 + $0x4a8] sm:$0xff]
        %v361 = vld [vmem:[%s176 + $0x4b0] sm:$0xff]
        %v362 = vld [vmem:[%s176 + $0x4b8] sm:$0xff]
        %v363 = vld [vmem:[%s176 + $0x4c0] sm:$0xff]
        %v364 = vld [vmem:[%s176 + $0x4c8] sm:$0xff]
        %v365 = vld [vmem:[%s176 + $0x4d0] sm:$0xff]
        %v366 = vld [vmem:[%s176 + $0x4d8] sm:$0xff]
        %v367 = vld [vmem:[%s176 + $0x4e0] sm:$0xff]
        %v368 = vld [vmem:[%s176 + $0x4e8] sm:$0xff]
        %v369 = vld [vmem:[%s176 + $0x4f0] sm:$0xff]
        %v370 = vld [vmem:[%s176 + $0x4f8] sm:$0xff]
        %v371 = vld [vmem:[%s176 + $0x500] sm:$0xff]
        %v372 = vld [vmem:[%s176 + $0x508] sm:$0xff]
        %v373 = vld [vmem:[%s176 + $0x510] sm:$0xff]
        %v374 = vld [vmem:[%s176 + $0x518] sm:$0xff]
        %v375 = vld [vmem:[%s176 + $0x520] sm:$0xff]
        %v376 = vld [vmem:[%s176 + $0x528] sm:$0xff]
        %v377 = vld [vmem:[%s176 + $0x530] sm:$0xff]
        %v378 = vld [vmem:[%s176 + $0x538] sm:$0xff]
        %v379 = vld [vmem:[%s176 + $0x540] sm:$0xff]
        %v380 = vld [vmem:[%s176 + $0x548] sm:$0xff]
        %v381 = vld [vmem:[%s176 + $0x550] sm:$0xff]
        %v382 = vld [vmem:[%s176 + $0x558] sm:$0xff]
        %v383 = vld [vmem:[%s176 + $0x560] sm:$0xff]
        %v384 = vld [vmem:[%s176 + $0x568] sm:$0xff]
        %v385 = vld [vmem:[%s176 + $0x570] sm:$0xff]
        %v386 = vld [vmem:[%s176 + $0x578] sm:$0xff]
        %v387 = vld [vmem:[%s176 + $0x580] sm:$0xff]
        %v388 = vld [vmem:[%s176 + $0x588] sm:$0xff]
        %v389 = vld [vmem:[%s176 + $0x590] sm:$0xff]
        %v390 = vld [vmem:[%s176 + $0x598] sm:$0xff]
        %v391 = vld [vmem:[%s176 + $0x5a0] sm:$0xff]
        %v392 = vld [vmem:[%s176 + $0x5a8] sm:$0xff]
        %v393 = vld [vmem:[%s176 + $0x5b0] sm:$0xff]
        %v394 = vld [vmem:[%s176 + $0x5b8] sm:$0xff]
        %v395 = vld [vmem:[%s176 + $0x5c0] sm:$0xff]
        %v396 = vld [vmem:[%s176 + $0x5c8] sm:$0xff]
        %v397 = vld [vmem:[%s176 + $0x5d0] sm:$0xff]
        %v398 = vld [vmem:[%s176 + $0x5d8] sm:$0xff]
        %v399 = vld [vmem:[%s176 + $0x5e0] sm:$0xff]
        %v400 = vld [vmem:[%s176 + $0x5e8] sm:$0xff]
        %v401 = vld [vmem:[%s176 + $0x5f0] sm:$0xff]
        %v402 = vld [vmem:[%s176 + $0x5f8] sm:$0xff]
        %v403 = vld [vmem:[%s176 + $0x600] sm:$0xff]
        %v404 = vld [vmem:[%s176 + $0x608] sm:$0xff]
        %v405 = vld [vmem:[%s176 + $0x610] sm:$0xff]
        %v406 = vld [vmem:[%s176 + $0x618] sm:$0xff]
        %v407 = vld [vmem:[%s176 + $0x620] sm:$0xff]
        %v408 = vld [vmem:[%s176 + $0x628] sm:$0xff]
        %v409 = vld [vmem:[%s176 + $0x630] sm:$0xff]
        %v410 = vld [vmem:[%s176 + $0x638] sm:$0xff]
        %v411 = vld [vmem:[%s176 + $0x640] sm:$0xff]
        %v412 = vld [vmem:[%s176 + $0x648] sm:$0xff]
        %v413 = vld [vmem:[%s176 + $0x650] sm:$0xff]
        %v414 = vld [vmem:[%s176 + $0x658] sm:$0xff]
        %v415 = vld [vmem:[%s176 + $0x660] sm:$0xff]
        %v416 = vld [vmem:[%s176 + $0x668] sm:$0xff]
        %v417 = vld [vmem:[%s176 + $0x670] sm:$0xff]
        %v418 = vld [vmem:[%s176 + $0x678] sm:$0xff]
        %v419 = vld [vmem:[%s176 + $0x680] sm:$0xff]
        %v420 = vld [vmem:[%s176 + $0x688] sm:$0xff]
        %v421 = vld [vmem:[%s176 + $0x690] sm:$0xff]
        %v422 = vld [vmem:[%s176 + $0x698] sm:$0xff]
        %v423 = vld [vmem:[%s176 + $0x6a0] sm:$0xff]
        %v424 = vld [vmem:[%s176 + $0x6a8] sm:$0xff]
        %v425 = vld [vmem:[%s176 + $0x6b0] sm:$0xff]
        %v426 = vld [vmem:[%s176 + $0x6b8] sm:$0xff]
        %v427 = vld [vmem:[%s176 + $0x6c0] sm:$0xff]
        %v428 = vld [vmem:[%s176 + $0x6c8] sm:$0xff]
        %v429 = vld [vmem:[%s176 + $0x6d0] sm:$0xff]
        %v430 = vld [vmem:[%s176 + $0x6d8] sm:$0xff]
        %v431 = vld [vmem:[%s176 + $0x6e0] sm:$0xff]
        %v432 = vld [vmem:[%s176 + $0x6e8] sm:$0xff]
        %v433 = vld [vmem:[%s176 + $0x6f0] sm:$0xff]
        %v434 = vld [vmem:[%s176 + $0x6f8] sm:$0xff]
        %v435 = vld [vmem:[%s176 + $0x700] sm:$0xff]
        %v436 = vld [vmem:[%s176 + $0x708] sm:$0xff]
        %v437 = vld [vmem:[%s176 + $0x710] sm:$0xff]
        %v438 = vld [vmem:[%s176 + $0x718] sm:$0xff]
        %v439 = vld [vmem:[%s176 + $0x720] sm:$0xff]
        %v440 = vld [vmem:[%s176 + $0x728] sm:$0xff]
        %v441 = vld [vmem:[%s176 + $0x730] sm:$0xff]
        %v442 = vld [vmem:[%s176 + $0x738] sm:$0xff]
        %v443 = vld [vmem:[%s176 + $0x740] sm:$0xff]
        %v444 = vld [vmem:[%s176 + $0x748] sm:$0xff]
        %v445 = vld [vmem:[%s176 + $0x750] sm:$0xff]
        %v446 = vld [vmem:[%s176 + $0x758] sm:$0xff]
        %v447 = vld [vmem:[%s176 + $0x760] sm:$0xff]
        %v448 = vld [vmem:[%s176 + $0x768] sm:$0xff]
        %v449 = vld [vmem:[%s176 + $0x770] sm:$0xff]
        %v450 = vld [vmem:[%s176 + $0x778] sm:$0xff]
        %v451 = vld [vmem:[%s176 + $0x780] sm:$0xff]
        %v452 = vld [vmem:[%s176 + $0x788] sm:$0xff]
        %v453 = vld [vmem:[%s176 + $0x790] sm:$0xff]
        %v454 = vld [vmem:[%s176 + $0x798] sm:$0xff]
        %v455 = vld [vmem:[%s176 + $0x7a0] sm:$0xff]
        %v456 = vld [vmem:[%s176 + $0x7a8] sm:$0xff]
        %v457 = vld [vmem:[%s176 + $0x7b0] sm:$0xff]
        %v458 = vld [vmem:[%s176 + $0x7b8] sm:$0xff]
        %v459 = vld [vmem:[%s176 + $0x7c0] sm:$0xff]
        %v460 = vld [vmem:[%s176 + $0x7c8] sm:$0xff]
        %v461 = vld [vmem:[%s176 + $0x7d0] sm:$0xff]
        %v462 = vld [vmem:[%s176 + $0x7d8] sm:$0xff]
        %v463 = vld [vmem:[%s176 + $0x7e0] sm:$0xff]
        %v464 = vld [vmem:[%s176 + $0x7e8] sm:$0xff]
        %v465 = vld [vmem:[%s176 + $0x7f0] sm:$0xff]
        %v466 = vld [vmem:[%s176 + $0x7f8] sm:$0xff]
        %v467 = vld [vmem:[%s176 + $0x800] sm:$0xff]
        %v468 = vld [vmem:[%s176 + $0x808] sm:$0xff]
        %v469 = vld [vmem:[%s176 + $0x810] sm:$0xff]
        %v470 = vld [vmem:[%s176 + $0x818] sm:$0xff]
        %v471 = vld [vmem:[%s176 + $0x820] sm:$0xff]
        %v472 = vld [vmem:[%s176 + $0x828] sm:$0xff]
        %v473 = vld [vmem:[%s176 + $0x830] sm:$0xff]
        %v474 = vld [vmem:[%s176 + $0x838] sm:$0xff]
        %v475 = vld [vmem:[%s176 + $0x840] sm:$0xff]
        %v476 = vld [vmem:[%s176 + $0x848] sm:$0xff]
        %v477 = vld [vmem:[%s176 + $0x850] sm:$0xff]
        %v478 = vld [vmem:[%s176 + $0x858] sm:$0xff]
        %v479 = vld [vmem:[%s176 + $0x860] sm:$0xff]
        %v480 = vld [vmem:[%s176 + $0x868] sm:$0xff]
        %v481 = vld [vmem:[%s176 + $0x870] sm:$0xff]
        %v482 = vld [vmem:[%s176 + $0x878] sm:$0xff]
        %v483 = vld [vmem:[%s176 + $0x880] sm:$0xff]
        %v484 = vld [vmem:[%s176 + $0x888] sm:$0xff]
        %v485 = vld [vmem:[%s176 + $0x890] sm:$0xff]
        %v486 = vld [vmem:[%s176 + $0x898] sm:$0xff]
        %v487 = vld [vmem:[%s176 + $0x8a0] sm:$0xff]
        %v488 = vld [vmem:[%s176 + $0x8a8] sm:$0xff]
        %v489 = vld [vmem:[%s176 + $0x8b0] sm:$0xff]
        %v490 = vld [vmem:[%s176 + $0x8b8] sm:$0xff]
        %v491 = vld [vmem:[%s176 + $0x8c0] sm:$0xff]
        %v492 = vld [vmem:[%s176 + $0x8c8] sm:$0xff]
        %v493 = vld [vmem:[%s176 + $0x8d0] sm:$0xff]
        %v494 = vld [vmem:[%s176 + $0x8d8] sm:$0xff]
        %v495 = vld [vmem:[%s176 + $0x8e0] sm:$0xff]
        %v496 = vld [vmem:[%s176 + $0x8e8] sm:$0xff]
        %v497 = vld [vmem:[%s176 + $0x8f0] sm:$0xff]
        %v498 = vld [vmem:[%s176 + $0x8f8] sm:$0xff]
        %v499 = vld [vmem:[%s176 + $0x900] sm:$0xff]
        %v500 = vld [vmem:[%s176 + $0x908] sm:$0xff]
        %v501 = vld [vmem:[%s176 + $0x910] sm:$0xff]
        %v502 = vld [vmem:[%s176 + $0x918] sm:$0xff]
        %v503 = vld [vmem:[%s176 + $0x920] sm:$0xff]
        %v504 = vld [vmem:[%s176 + $0x928] sm:$0xff]
        %v505 = vld [vmem:[%s176 + $0x930] sm:$0xff]
        %v506 = vld [vmem:[%s176 + $0x938] sm:$0xff]
        %v507 = vld [vmem:[%s176 + $0x940] sm:$0xff]
        %v508 = vld [vmem:[%s176 + $0x948] sm:$0xff]
        %v509 = vld [vmem:[%s176 + $0x950] sm:$0xff]
        %v510 = vld [vmem:[%s176 + $0x958] sm:$0xff]
        %v511 = vld [vmem:[%s176 + $0x960] sm:$0xff]
        %v512 = vld [vmem:[%s176 + $0x968] sm:$0xff]
        %v513 = vld [vmem:[%s176 + $0x970] sm:$0xff]
        %v514 = vld [vmem:[%s176 + $0x978] sm:$0xff]
        %v515 = vld [vmem:[%s176 + $0x980] sm:$0xff]
        %v516 = vld [vmem:[%s176 + $0x988] sm:$0xff]
        %v517 = vld [vmem:[%s176 + $0x990] sm:$0xff]
        %v518 = vld [vmem:[%s176 + $0x998] sm:$0xff]
        %v519 = vld [vmem:[%s176 + $0x9a0] sm:$0xff]
        %v520 = vld [vmem:[%s176 + $0x9a8] sm:$0xff]
        %v521 = vld [vmem:[%s176 + $0x9b0] sm:$0xff]
        %v522 = vld [vmem:[%s176 + $0x9b8] sm:$0xff]
        %v523 = vld [vmem:[%s176 + $0x9c0] sm:$0xff]
        %v524 = vld [vmem:[%s176 + $0x9c8] sm:$0xff]
        %v525 = vld [vmem:[%s176 + $0x9d0] sm:$0xff]
        %v526 = vld [vmem:[%s176 + $0x9d8] sm:$0xff]
        %v527 = vld [vmem:[%s176 + $0x9e0] sm:$0xff]
        %v528 = vld [vmem:[%s176 + $0x9e8] sm:$0xff]
        %v529 = vld [vmem:[%s176 + $0x9f0] sm:$0xff]
        %v530 = vld [vmem:[%s176 + $0x9f8] sm:$0xff]
        %v531 = vld [vmem:[%s176 + $0xa00] sm:$0xff]
        %v532 = vld [vmem:[%s176 + $0xa08] sm:$0xff]
        %v533 = vld [vmem:[%s176 + $0xa10] sm:$0xff]
        %v534 = vld [vmem:[%s176 + $0xa18] sm:$0xff]
        %v535 = vld [vmem:[%s176 + $0xa20] sm:$0xff]
        %v536 = vld [vmem:[%s176 + $0xa28] sm:$0xff]
        %v537 = vld [vmem:[%s176 + $0xa30] sm:$0xff]
        %v538 = vld [vmem:[%s176 + $0xa38] sm:$0xff]
        %v539 = vld [vmem:[%s176 + $0xa40] sm:$0xff]
        %v540 = vld [vmem:[%s176 + $0xa48] sm:$0xff]
        %v541 = vld [vmem:[%s176 + $0xa50] sm:$0xff]
        %v542 = vld [vmem:[%s176 + $0xa58] sm:$0xff]
        %v543 = vld [vmem:[%s176 + $0xa60] sm:$0xff]
        %v544 = vld [vmem:[%s176 + $0xa68] sm:$0xff]
        %v545 = vld [vmem:[%s176 + $0xa70] sm:$0xff]
        %v546 = vld [vmem:[%s176 + $0xa78] sm:$0xff]
        %v547 = vld [vmem:[%s176 + $0xa80] sm:$0xff]
        %v548 = vld [vmem:[%s176 + $0xa88] sm:$0xff]
        %v549 = vld [vmem:[%s176 + $0xa90] sm:$0xff]
        %v550 = vld [vmem:[%s176 + $0xa98] sm:$0xff]
        %v551 = vld [vmem:[%s176 + $0xaa0] sm:$0xff]
        %v552 = vld [vmem:[%s176 + $0xaa8] sm:$0xff]
        %v553 = vld [vmem:[%s176 + $0xab0] sm:$0xff]
        %v554 = vld [vmem:[%s176 + $0xab8] sm:$0xff]
        %v555 = vld [vmem:[%s176 + $0xac0] sm:$0xff]
        %v556 = vld [vmem:[%s176 + $0xac8] sm:$0xff]
        %v557 = vld [vmem:[%s176 + $0xad0] sm:$0xff]
        %v558 = vld [vmem:[%s176 + $0xad8] sm:$0xff]
        %v559 = vld [vmem:[%s176 + $0xae0] sm:$0xff]
        %v560 = vld [vmem:[%s176 + $0xae8] sm:$0xff]
        %v561 = vld [vmem:[%s176 + $0xaf0] sm:$0xff]
        %v562 = vld [vmem:[%s176 + $0xaf8] sm:$0xff]
        %v563 = vld [vmem:[%s176 + $0xb00] sm:$0xff]
        %v564 = vld [vmem:[%s176 + $0xb08] sm:$0xff]
        %v565 = vld [vmem:[%s176 + $0xb10] sm:$0xff]
        %v566 = vld [vmem:[%s176 + $0xb18] sm:$0xff]
        %v567 = vld [vmem:[%s176 + $0xb20] sm:$0xff]
        %v568 = vld [vmem:[%s176 + $0xb28] sm:$0xff]
        %v569 = vld [vmem:[%s176 + $0xb30] sm:$0xff]
        %v570 = vld [vmem:[%s176 + $0xb38] sm:$0xff]
        %v571 = vld [vmem:[%s176 + $0xb40] sm:$0xff]
        %v572 = vld [vmem:[%s176 + $0xb48] sm:$0xff]
        %v573 = vld [vmem:[%s176 + $0xb50] sm:$0xff]
        %v574 = vld [vmem:[%s176 + $0xb58] sm:$0xff]
        %v575 = vld [vmem:[%s176 + $0xb60] sm:$0xff]
        %v576 = vld [vmem:[%s176 + $0xb68] sm:$0xff]
        %v577 = vld [vmem:[%s176 + $0xb70] sm:$0xff]
        %v578 = vld [vmem:[%s176 + $0xb78] sm:$0xff]
        %v579 = vld [vmem:[%s176 + $0xb80] sm:$0xff]
        %v580 = vld [vmem:[%s176 + $0xb88] sm:$0xff]
        %v581 = vld [vmem:[%s176 + $0xb90] sm:$0xff]
        %v582 = vld [vmem:[%s176 + $0xb98] sm:$0xff]
        %v583 = vld [vmem:[%s176 + $0xba0] sm:$0xff]
        %v584 = vld [vmem:[%s176 + $0xba8] sm:$0xff]
        %v585 = vld [vmem:[%s176 + $0xbb0] sm:$0xff]
        %v586 = vld [vmem:[%s176 + $0xbb8] sm:$0xff]
        %v587 = vld [vmem:[%s176 + $0xbc0] sm:$0xff]
        %v588 = vld [vmem:[%s176 + $0xbc8] sm:$0xff]
        %v589 = vld [vmem:[%s176 + $0xbd0] sm:$0xff]
        %v590 = vld [vmem:[%s176 + $0xbd8] sm:$0xff]
        %v591 = vld [vmem:[%s176 + $0xbe0] sm:$0xff]
        %v592 = vld [vmem:[%s176 + $0xbe8] sm:$0xff]
        %v593 = vld [vmem:[%s176 + $0xbf0] sm:$0xff]
        %v594 = vld [vmem:[%s176 + $0xbf8] sm:$0xff]
        %v595 = vld [vmem:[%s176 + $0xc00] sm:$0xff]
        %v596 = vld [vmem:[%s176 + $0xc08] sm:$0xff]
        %v597 = vld [vmem:[%s176 + $0xc10] sm:$0xff]
        %v598 = vld [vmem:[%s176 + $0xc18] sm:$0xff]
        %v599 = vld [vmem:[%s176 + $0xc20] sm:$0xff]
        %v600 = vld [vmem:[%s176 + $0xc28] sm:$0xff]
        %v601 = vld [vmem:[%s176 + $0xc30] sm:$0xff]
        %v602 = vld [vmem:[%s176 + $0xc38] sm:$0xff]
        %v603 = vld [vmem:[%s176 + $0xc40] sm:$0xff]
        %v604 = vld [vmem:[%s176 + $0xc48] sm:$0xff]
        %v605 = vld [vmem:[%s176 + $0xc50] sm:$0xff]
        %v606 = vld [vmem:[%s176 + $0xc58] sm:$0xff]
        %v607 = vld [vmem:[%s176 + $0xc60] sm:$0xff]
        %v608 = vld [vmem:[%s176 + $0xc68] sm:$0xff]
        %v609 = vld [vmem:[%s176 + $0xc70] sm:$0xff]
        %v610 = vld [vmem:[%s176 + $0xc78] sm:$0xff]
        %v611 = vld [vmem:[%s176 + $0xc80] sm:$0xff]
        %v612 = vld [vmem:[%s176 + $0xc88] sm:$0xff]
        %v613 = vld [vmem:[%s176 + $0xc90] sm:$0xff]
        %v614 = vld [vmem:[%s176 + $0xc98] sm:$0xff]
        %v615 = vld [vmem:[%s176 + $0xca0] sm:$0xff]
        %v616 = vld [vmem:[%s176 + $0xca8] sm:$0xff]
        %v617 = vld [vmem:[%s176 + $0xcb0] sm:$0xff]
        %v618 = vld [vmem:[%s176 + $0xcb8] sm:$0xff]
        %v619 = vld [vmem:[%s176 + $0xcc0] sm:$0xff]
        %v620 = vld [vmem:[%s176 + $0xcc8] sm:$0xff]
        %v621 = vld [vmem:[%s176 + $0xcd0] sm:$0xff]
        %v622 = vld [vmem:[%s176 + $0xcd8] sm:$0xff]
        %v623 = vld [vmem:[%s176 + $0xce0] sm:$0xff]
        %v624 = vld [vmem:[%s176 + $0xce8] sm:$0xff]
        %v625 = vld [vmem:[%s176 + $0xcf0] sm:$0xff]
        %v626 = vld [vmem:[%s176 + $0xcf8] sm:$0xff]
        %v627 = vld [vmem:[%s176 + $0xd00] sm:$0xff]
        %v628 = vld [vmem:[%s176 + $0xd08] sm:$0xff]
        %v629 = vld [vmem:[%s176 + $0xd10] sm:$0xff]
        %v630 = vld [vmem:[%s176 + $0xd18] sm:$0xff]
        %v631 = vld [vmem:[%s176 + $0xd20] sm:$0xff]
        %v632 = vld [vmem:[%s176 + $0xd28] sm:$0xff]
        %v633 = vld [vmem:[%s176 + $0xd30] sm:$0xff]
        %v634 = vld [vmem:[%s176 + $0xd38] sm:$0xff]
        %v635 = vld [vmem:[%s176 + $0xd40] sm:$0xff]
        %v636 = vld [vmem:[%s176 + $0xd48] sm:$0xff]
        %v637 = vld [vmem:[%s176 + $0xd50] sm:$0xff]
        %v638 = vld [vmem:[%s176 + $0xd58] sm:$0xff]
        %v639 = vld [vmem:[%s176 + $0xd60] sm:$0xff]
        %v640 = vld [vmem:[%s176 + $0xd68] sm:$0xff]
        %v641 = vld [vmem:[%s176 + $0xd70] sm:$0xff]
        %v642 = vld [vmem:[%s176 + $0xd78] sm:$0xff]
        %v643 = vld [vmem:[%s176 + $0xd80] sm:$0xff]
        %v644 = vld [vmem:[%s176 + $0xd88] sm:$0xff]
        %v645 = vld [vmem:[%s176 + $0xd90] sm:$0xff]
        %v646 = vld [vmem:[%s176 + $0xd98] sm:$0xff]
        %v647 = vld [vmem:[%s176 + $0xda0] sm:$0xff]
        %v648 = vld [vmem:[%s176 + $0xda8] sm:$0xff]
        %v649 = vld [vmem:[%s176 + $0xdb0] sm:$0xff]
        %v650 = vld [vmem:[%s176 + $0xdb8] sm:$0xff]
        %v651 = vld [vmem:[%s176 + $0xdc0] sm:$0xff]
        %v652 = vld [vmem:[%s176 + $0xdc8] sm:$0xff]
        %v653 = vld [vmem:[%s176 + $0xdd0] sm:$0xff]
        %v654 = vld [vmem:[%s176 + $0xdd8] sm:$0xff]
        %v655 = vld [vmem:[%s176 + $0xde0] sm:$0xff]
        %v656 = vld [vmem:[%s176 + $0xde8] sm:$0xff]
        %v657 = vld [vmem:[%s176 + $0xdf0] sm:$0xff]
        %v658 = vld [vmem:[%s176 + $0xdf8] sm:$0xff]
        %v659 = vld [vmem:[%s176 + $0xe00] sm:$0xff]
        %v660 = vld [vmem:[%s176 + $0xe08] sm:$0xff]
        %v661 = vld [vmem:[%s176 + $0xe10] sm:$0xff]
        %v662 = vld [vmem:[%s176 + $0xe18] sm:$0xff]
        %v663 = vld [vmem:[%s176 + $0xe20] sm:$0xff]
        %v664 = vld [vmem:[%s176 + $0xe28] sm:$0xff]
        %v665 = vld [vmem:[%s176 + $0xe30] sm:$0xff]
        %v666 = vld [vmem:[%s176 + $0xe38] sm:$0xff]
        %v667 = vld [vmem:[%s176 + $0xe40] sm:$0xff]
        %v668 = vld [vmem:[%s176 + $0xe48] sm:$0xff]
        %v669 = vld [vmem:[%s176 + $0xe50] sm:$0xff]
        %v670 = vld [vmem:[%s176 + $0xe58] sm:$0xff]
        %v671 = vld [vmem:[%s176 + $0xe60] sm:$0xff]
        %v672 = vld [vmem:[%s176 + $0xe68] sm:$0xff]
        %v673 = vld [vmem:[%s176 + $0xe70] sm:$0xff]
        %v674 = vld [vmem:[%s176 + $0xe78] sm:$0xff]
        %v675 = vld [vmem:[%s176 + $0xe80] sm:$0xff]
        %v676 = vld [vmem:[%s176 + $0xe88] sm:$0xff]
        %v677 = vld [vmem:[%s176 + $0xe90] sm:$0xff]
        %v678 = vld [vmem:[%s176 + $0xe98] sm:$0xff]
        %v679 = vld [vmem:[%s176 + $0xea0] sm:$0xff]
        %v680 = vld [vmem:[%s176 + $0xea8] sm:$0xff]
        %v681 = vld [vmem:[%s176 + $0xeb0] sm:$0xff]
        %v682 = vld [vmem:[%s176 + $0xeb8] sm:$0xff]
        %v683 = vld [vmem:[%s176 + $0xec0] sm:$0xff]
        %v684 = vld [vmem:[%s176 + $0xec8] sm:$0xff]
        %v685 = vld [vmem:[%s176 + $0xed0] sm:$0xff]
        %v686 = vld [vmem:[%s176 + $0xed8] sm:$0xff]
        %v687 = vld [vmem:[%s176 + $0xee0] sm:$0xff]
        %v688 = vld [vmem:[%s176 + $0xee8] sm:$0xff]
        %v689 = vld [vmem:[%s176 + $0xef0] sm:$0xff]
        %v690 = vld [vmem:[%s176 + $0xef8] sm:$0xff]
        %v691 = vld [vmem:[%s176 + $0xf00] sm:$0xff]
        %v692 = vld [vmem:[%s176 + $0xf08] sm:$0xff]
        %v693 = vld [vmem:[%s176 + $0xf10] sm:$0xff]
        %v694 = vld [vmem:[%s176 + $0xf18] sm:$0xff]
        %v695 = vld [vmem:[%s176 + $0xf20] sm:$0xff]
        %v696 = vld [vmem:[%s176 + $0xf28] sm:$0xff]
        %v697 = vld [vmem:[%s176 + $0xf30] sm:$0xff]
        %v698 = vld [vmem:[%s176 + $0xf38] sm:$0xff]
        %v699 = vld [vmem:[%s176 + $0xf40] sm:$0xff]
        %v700 = vld [vmem:[%s176 + $0xf48] sm:$0xff]
        %v701 = vld [vmem:[%s176 + $0xf50] sm:$0xff]
        %v702 = vld [vmem:[%s176 + $0xf58] sm:$0xff]
        %v703 = vld [vmem:[%s176 + $0xf60] sm:$0xff]
        %v704 = vld [vmem:[%s176 + $0xf68] sm:$0xff]
        %v705 = vld [vmem:[%s176 + $0xf70] sm:$0xff]
        %v706 = vld [vmem:[%s176 + $0xf78] sm:$0xff]
        %v707 = vld [vmem:[%s176 + $0xf80] sm:$0xff]
        %v708 = vld [vmem:[%s176 + $0xf88] sm:$0xff]
        %v709 = vld [vmem:[%s176 + $0xf90] sm:$0xff]
        %v710 = vld [vmem:[%s176 + $0xf98] sm:$0xff]
        %v711 = vld [vmem:[%s176 + $0xfa0] sm:$0xff]
        %v712 = vld [vmem:[%s176 + $0xfa8] sm:$0xff]
        %v713 = vld [vmem:[%s176 + $0xfb0] sm:$0xff]
        %v714 = vld [vmem:[%s176 + $0xfb8] sm:$0xff]
        %v715 = vld [vmem:[%s176 + $0xfc0] sm:$0xff]
        %v716 = vld [vmem:[%s176 + $0xfc8] sm:$0xff]
        %v717 = vld [vmem:[%s176 + $0xfd0] sm:$0xff]
        %v718 = vld [vmem:[%s176 + $0xfd8] sm:$0xff]
        %v719 = vld [vmem:[%s176 + $0xfe0] sm:$0xff]
        %v720 = vld [vmem:[%s176 + $0xfe8] sm:$0xff]
        %v721 = vld [vmem:[%s176 + $0xff0] sm:$0xff]
        %v722 = vld [vmem:[%s176 + $0xff8] sm:$0xff]
        %s723 = sld [smem:[#allocation2]]
        %v724 = vstv %s723
        %v725 = vmul.f32 %v211, %v724
        %v726 = vmul.f32 %v212, %v724
        %v727 = vmul.f32 %v213, %v724
        %v728 = vmul.f32 %v214, %v724
        %v729 = vmul.f32 %v215, %v724
        %v730 = vmul.f32 %v216, %v724
        %v731 = vmul.f32 %v217, %v724
        %v732 = vmul.f32 %v218, %v724
        %v733 = vmul.f32 %v219, %v724
        %v734 = vmul.f32 %v220, %v724
        %v735 = vmul.f32 %v221, %v724
        %v736 = vmul.f32 %v222, %v724
        %v737 = vmul.f32 %v223, %v724
        %v738 = vmul.f32 %v224, %v724
        %v739 = vmul.f32 %v225, %v724
        %v740 = vmul.f32 %v226, %v724
        %v741 = vmul.f32 %v227, %v724
        %v742 = vmul.f32 %v228, %v724
        %v743 = vmul.f32 %v229, %v724
        %v744 = vmul.f32 %v230, %v724
        %v745 = vmul.f32 %v231, %v724
        %v746 = vmul.f32 %v232, %v724
        %v747 = vmul.f32 %v233, %v724
        %v748 = vmul.f32 %v234, %v724
        %v749 = vmul.f32 %v235, %v724
        %v750 = vmul.f32 %v236, %v724
        %v751 = vmul.f32 %v237, %v724
        %v752 = vmul.f32 %v238, %v724
        %v753 = vmul.f32 %v239, %v724
        %v754 = vmul.f32 %v240, %v724
        %v755 = vmul.f32 %v241, %v724
        %v756 = vmul.f32 %v242, %v724
        %v757 = vmul.f32 %v243, %v724
        %v758 = vmul.f32 %v244, %v724
        %v759 = vmul.f32 %v245, %v724
        %v760 = vmul.f32 %v246, %v724
        %v761 = vmul.f32 %v247, %v724
        %v762 = vmul.f32 %v248, %v724
        %v763 = vmul.f32 %v249, %v724
        %v764 = vmul.f32 %v250, %v724
        %v765 = vmul.f32 %v251, %v724
        %v766 = vmul.f32 %v252, %v724
        %v767 = vmul.f32 %v253, %v724
        %v768 = vmul.f32 %v254, %v724
        %v769 = vmul.f32 %v255, %v724
        %v770 = vmul.f32 %v256, %v724
        %v771 = vmul.f32 %v257, %v724
        %v772 = vmul.f32 %v258, %v724
        %v773 = vmul.f32 %v259, %v724
        %v774 = vmul.f32 %v260, %v724
        %v775 = vmul.f32 %v261, %v724
        %v776 = vmul.f32 %v262, %v724
        %v777 = vmul.f32 %v263, %v724
        %v778 = vmul.f32 %v264, %v724
        %v779 = vmul.f32 %v265, %v724
        %v780 = vmul.f32 %v266, %v724
        %v781 = vmul.f32 %v267, %v724
        %v782 = vmul.f32 %v268, %v724
        %v783 = vmul.f32 %v269, %v724
        %v784 = vmul.f32 %v270, %v724
        %v785 = vmul.f32 %v271, %v724
        %v786 = vmul.f32 %v272, %v724
        %v787 = vmul.f32 %v273, %v724
        %v788 = vmul.f32 %v274, %v724
        %v789 = vmul.f32 %v275, %v724
        %v790 = vmul.f32 %v276, %v724
        %v791 = vmul.f32 %v277, %v724
        %v792 = vmul.f32 %v278, %v724
        %v793 = vmul.f32 %v279, %v724
        %v794 = vmul.f32 %v280, %v724
        %v795 = vmul.f32 %v281, %v724
        %v796 = vmul.f32 %v282, %v724
        %v797 = vmul.f32 %v283, %v724
        %v798 = vmul.f32 %v284, %v724
        %v799 = vmul.f32 %v285, %v724
        %v800 = vmul.f32 %v286, %v724
        %v801 = vmul.f32 %v287, %v724
        %v802 = vmul.f32 %v288, %v724
        %v803 = vmul.f32 %v289, %v724
        %v804 = vmul.f32 %v290, %v724
        %v805 = vmul.f32 %v291, %v724
        %v806 = vmul.f32 %v292, %v724
        %v807 = vmul.f32 %v293, %v724
        %v808 = vmul.f32 %v294, %v724
        %v809 = vmul.f32 %v295, %v724
        %v810 = vmul.f32 %v296, %v724
        %v811 = vmul.f32 %v297, %v724
        %v812 = vmul.f32 %v298, %v724
        %v813 = vmul.f32 %v299, %v724
        %v814 = vmul.f32 %v300, %v724
        %v815 = vmul.f32 %v301, %v724
        %v816 = vmul.f32 %v302, %v724
        %v817 = vmul.f32 %v303, %v724
        %v818 = vmul.f32 %v304, %v724
        %v819 = vmul.f32 %v305, %v724
        %v820 = vmul.f32 %v306, %v724
        %v821 = vmul.f32 %v307, %v724
        %v822 = vmul.f32 %v308, %v724
        %v823 = vmul.f32 %v309, %v724
        %v824 = vmul.f32 %v310, %v724
        %v825 = vmul.f32 %v311, %v724
        %v826 = vmul.f32 %v312, %v724
        %v827 = vmul.f32 %v313, %v724
        %v828 = vmul.f32 %v314, %v724
        %v829 = vmul.f32 %v315, %v724
        %v830 = vmul.f32 %v316, %v724
        %v831 = vmul.f32 %v317, %v724
        %v832 = vmul.f32 %v318, %v724
        %v833 = vmul.f32 %v319, %v724
        %v834 = vmul.f32 %v320, %v724
        %v835 = vmul.f32 %v321, %v724
        %v836 = vmul.f32 %v322, %v724
        %v837 = vmul.f32 %v323, %v724
        %v838 = vmul.f32 %v324, %v724
        %v839 = vmul.f32 %v325, %v724
        %v840 = vmul.f32 %v326, %v724
        %v841 = vmul.f32 %v327, %v724
        %v842 = vmul.f32 %v328, %v724
        %v843 = vmul.f32 %v329, %v724
        %v844 = vmul.f32 %v330, %v724
        %v845 = vmul.f32 %v331, %v724
        %v846 = vmul.f32 %v332, %v724
        %v847 = vmul.f32 %v333, %v724
        %v848 = vmul.f32 %v334, %v724
        %v849 = vmul.f32 %v335, %v724
        %v850 = vmul.f32 %v336, %v724
        %v851 = vmul.f32 %v337, %v724
        %v852 = vmul.f32 %v338, %v724
        %v853 = vmul.f32 %v339, %v724
        %v854 = vmul.f32 %v340, %v724
        %v855 = vmul.f32 %v341, %v724
        %v856 = vmul.f32 %v342, %v724
        %v857 = vmul.f32 %v343, %v724
        %v858 = vmul.f32 %v344, %v724
        %v859 = vmul.f32 %v345, %v724
        %v860 = vmul.f32 %v346, %v724
        %v861 = vmul.f32 %v347, %v724
        %v862 = vmul.f32 %v348, %v724
        %v863 = vmul.f32 %v349, %v724
        %v864 = vmul.f32 %v350, %v724
        %v865 = vmul.f32 %v351, %v724
        %v866 = vmul.f32 %v352, %v724
        %v867 = vmul.f32 %v353, %v724
        %v868 = vmul.f32 %v354, %v724
        %v869 = vmul.f32 %v355, %v724
        %v870 = vmul.f32 %v356, %v724
        %v871 = vmul.f32 %v357, %v724
        %v872 = vmul.f32 %v358, %v724
        %v873 = vmul.f32 %v359, %v724
        %v874 = vmul.f32 %v360, %v724
        %v875 = vmul.f32 %v361, %v724
        %v876 = vmul.f32 %v362, %v724
        %v877 = vmul.f32 %v363, %v724
        %v878 = vmul.f32 %v364, %v724
        %v879 = vmul.f32 %v365, %v724
        %v880 = vmul.f32 %v366, %v724
        %v881 = vmul.f32 %v367, %v724
        %v882 = vmul.f32 %v368, %v724
        %v883 = vmul.f32 %v369, %v724
        %v884 = vmul.f32 %v370, %v724
        %v885 = vmul.f32 %v371, %v724
        %v886 = vmul.f32 %v372, %v724
        %v887 = vmul.f32 %v373, %v724
        %v888 = vmul.f32 %v374, %v724
        %v889 = vmul.f32 %v375, %v724
        %v890 = vmul.f32 %v376, %v724
        %v891 = vmul.f32 %v377, %v724
        %v892 = vmul.f32 %v378, %v724
        %v893 = vmul.f32 %v379, %v724
        %v894 = vmul.f32 %v380, %v724
        %v895 = vmul.f32 %v381, %v724
        %v896 = vmul.f32 %v382, %v724
        %v897 = vmul.f32 %v383, %v724
        %v898 = vmul.f32 %v384, %v724
        %v899 = vmul.f32 %v385, %v724
        %v900 = vmul.f32 %v386, %v724
        %v901 = vmul.f32 %v387, %v724
        %v902 = vmul.f32 %v388, %v724
        %v903 = vmul.f32 %v389, %v724
        %v904 = vmul.f32 %v390, %v724
        %v905 = vmul.f32 %v391, %v724
        %v906 = vmul.f32 %v392, %v724
        %v907 = vmul.f32 %v393, %v724
        %v908 = vmul.f32 %v394, %v724
        %v909 = vmul.f32 %v395, %v724
        %v910 = vmul.f32 %v396, %v724
        %v911 = vmul.f32 %v397, %v724
        %v912 = vmul.f32 %v398, %v724
        %v913 = vmul.f32 %v399, %v724
        %v914 = vmul.f32 %v400, %v724
        %v915 = vmul.f32 %v401, %v724
        %v916 = vmul.f32 %v402, %v724
        %v917 = vmul.f32 %v403, %v724
        %v918 = vmul.f32 %v404, %v724
        %v919 = vmul.f32 %v405, %v724
        %v920 = vmul.f32 %v406, %v724
        %v921 = vmul.f32 %v407, %v724
        %v922 = vmul.f32 %v408, %v724
        %v923 = vmul.f32 %v409, %v724
        %v924 = vmul.f32 %v410, %v724
        %v925 = vmul.f32 %v411, %v724
        %v926 = vmul.f32 %v412, %v724
        %v927 = vmul.f32 %v413, %v724
        %v928 = vmul.f32 %v414, %v724
        %v929 = vmul.f32 %v415, %v724
        %v930 = vmul.f32 %v416, %v724
        %v931 = vmul.f32 %v417, %v724
        %v932 = vmul.f32 %v418, %v724
        %v933 = vmul.f32 %v419, %v724
        %v934 = vmul.f32 %v420, %v724
        %v935 = vmul.f32 %v421, %v724
        %v936 = vmul.f32 %v422, %v724
        %v937 = vmul.f32 %v423, %v724
        %v938 = vmul.f32 %v424, %v724
        %v939 = vmul.f32 %v425, %v724
        %v940 = vmul.f32 %v426, %v724
        %v941 = vmul.f32 %v427, %v724
        %v942 = vmul.f32 %v428, %v724
        %v943 = vmul.f32 %v429, %v724
        %v944 = vmul.f32 %v430, %v724
        %v945 = vmul.f32 %v431, %v724
        %v946 = vmul.f32 %v432, %v724
        %v947 = vmul.f32 %v433, %v724
        %v948 = vmul.f32 %v434, %v724
        %v949 = vmul.f32 %v435, %v724
        %v950 = vmul.f32 %v436, %v724
        %v951 = vmul.f32 %v437, %v724
        %v952 = vmul.f32 %v438, %v724
        %v953 = vmul.f32 %v439, %v724
        %v954 = vmul.f32 %v440, %v724
        %v955 = vmul.f32 %v441, %v724
        %v956 = vmul.f32 %v442, %v724
        %v957 = vmul.f32 %v443, %v724
        %v958 = vmul.f32 %v444, %v724
        %v959 = vmul.f32 %v445, %v724
        %v960 = vmul.f32 %v446, %v724
        %v961 = vmul.f32 %v447, %v724
        %v962 = vmul.f32 %v448, %v724
        %v963 = vmul.f32 %v449, %v724
        %v964 = vmul.f32 %v450, %v724
        %v965 = vmul.f32 %v451, %v724
        %v966 = vmul.f32 %v452, %v724
        %v967 = vmul.f32 %v453, %v724
        %v968 = vmul.f32 %v454, %v724
        %v969 = vmul.f32 %v455, %v724
        %v970 = vmul.f32 %v456, %v724
        %v971 = vmul.f32 %v457, %v724
        %v972 = vmul.f32 %v458, %v724
        %v973 = vmul.f32 %v459, %v724
        %v974 = vmul.f32 %v460, %v724
        %v975 = vmul.f32 %v461, %v724
        %v976 = vmul.f32 %v462, %v724
        %v977 = vmul.f32 %v463, %v724
        %v978 = vmul.f32 %v464, %v724
        %v979 = vmul.f32 %v465, %v724
        %v980 = vmul.f32 %v466, %v724
        %v981 = vmul.f32 %v467, %v724
        %v982 = vmul.f32 %v468, %v724
        %v983 = vmul.f32 %v469, %v724
        %v984 = vmul.f32 %v470, %v724
        %v985 = vmul.f32 %v471, %v724
        %v986 = vmul.f32 %v472, %v724
        %v987 = vmul.f32 %v473, %v724
        %v988 = vmul.f32 %v474, %v724
        %v989 = vmul.f32 %v475, %v724
        %v990 = vmul.f32 %v476, %v724
        %v991 = vmul.f32 %v477, %v724
        %v992 = vmul.f32 %v478, %v724
        %v993 = vmul.f32 %v479, %v724
        %v994 = vmul.f32 %v480, %v724
        %v995 = vmul.f32 %v481, %v724
        %v996 = vmul.f32 %v482, %v724
        %v997 = vmul.f32 %v483, %v724
        %v998 = vmul.f32 %v484, %v724
        %v999 = vmul.f32 %v485, %v724
        %v1000 = vmul.f32 %v486, %v724
        %v1001 = vmul.f32 %v487, %v724
        %v1002 = vmul.f32 %v488, %v724
        %v1003 = vmul.f32 %v489, %v724
        %v1004 = vmul.f32 %v490, %v724
        %v1005 = vmul.f32 %v491, %v724
        %v1006 = vmul.f32 %v492, %v724
        %v1007 = vmul.f32 %v493, %v724
        %v1008 = vmul.f32 %v494, %v724
        %v1009 = vmul.f32 %v495, %v724
        %v1010 = vmul.f32 %v496, %v724
        %v1011 = vmul.f32 %v497, %v724
        %v1012 = vmul.f32 %v498, %v724
        %v1013 = vmul.f32 %v499, %v724
        %v1014 = vmul.f32 %v500, %v724
        %v1015 = vmul.f32 %v501, %v724
        %v1016 = vmul.f32 %v502, %v724
        %v1017 = vmul.f32 %v503, %v724
        %v1018 = vmul.f32 %v504, %v724
        %v1019 = vmul.f32 %v505, %v724
        %v1020 = vmul.f32 %v506, %v724
        %v1021 = vmul.f32 %v507, %v724
        %v1022 = vmul.f32 %v508, %v724
        %v1023 = vmul.f32 %v509, %v724
        %v1024 = vmul.f32 %v510, %v724
        %v1025 = vmul.f32 %v511, %v724
        %v1026 = vmul.f32 %v512, %v724
        %v1027 = vmul.f32 %v513, %v724
        %v1028 = vmul.f32 %v514, %v724
        %v1029 = vmul.f32 %v515, %v724
        %v1030 = vmul.f32 %v516, %v724
        %v1031 = vmul.f32 %v517, %v724
        %v1032 = vmul.f32 %v518, %v724
        %v1033 = vmul.f32 %v519, %v724
        %v1034 = vmul.f32 %v520, %v724
        %v1035 = vmul.f32 %v521, %v724
        %v1036 = vmul.f32 %v522, %v724
        %v1037 = vmul.f32 %v523, %v724
        %v1038 = vmul.f32 %v524, %v724
        %v1039 = vmul.f32 %v525, %v724
        %v1040 = vmul.f32 %v526, %v724
        %v1041 = vmul.f32 %v527, %v724
        %v1042 = vmul.f32 %v528, %v724
        %v1043 = vmul.f32 %v529, %v724
        %v1044 = vmul.f32 %v530, %v724
        %v1045 = vmul.f32 %v531, %v724
        %v1046 = vmul.f32 %v532, %v724
        %v1047 = vmul.f32 %v533, %v724
        %v1048 = vmul.f32 %v534, %v724
        %v1049 = vmul.f32 %v535, %v724
        %v1050 = vmul.f32 %v536, %v724
        %v1051 = vmul.f32 %v537, %v724
        %v1052 = vmul.f32 %v538, %v724
        %v1053 = vmul.f32 %v539, %v724
        %v1054 = vmul.f32 %v540, %v724
        %v1055 = vmul.f32 %v541, %v724
        %v1056 = vmul.f32 %v542, %v724
        %v1057 = vmul.f32 %v543, %v724
        %v1058 = vmul.f32 %v544, %v724
        %v1059 = vmul.f32 %v545, %v724
        %v1060 = vmul.f32 %v546, %v724
        %v1061 = vmul.f32 %v547, %v724
        %v1062 = vmul.f32 %v548, %v724
        %v1063 = vmul.f32 %v549, %v724
        %v1064 = vmul.f32 %v550, %v724
        %v1065 = vmul.f32 %v551, %v724
        %v1066 = vmul.f32 %v552, %v724
        %v1067 = vmul.f32 %v553, %v724
        %v1068 = vmul.f32 %v554, %v724
        %v1069 = vmul.f32 %v555, %v724
        %v1070 = vmul.f32 %v556, %v724
        %v1071 = vmul.f32 %v557, %v724
        %v1072 = vmul.f32 %v558, %v724
        %v1073 = vmul.f32 %v559, %v724
        %v1074 = vmul.f32 %v560, %v724
        %v1075 = vmul.f32 %v561, %v724
        %v1076 = vmul.f32 %v562, %v724
        %v1077 = vmul.f32 %v563, %v724
        %v1078 = vmul.f32 %v564, %v724
        %v1079 = vmul.f32 %v565, %v724
        %v1080 = vmul.f32 %v566, %v724
        %v1081 = vmul.f32 %v567, %v724
        %v1082 = vmul.f32 %v568, %v724
        %v1083 = vmul.f32 %v569, %v724
        %v1084 = vmul.f32 %v570, %v724
        %v1085 = vmul.f32 %v571, %v724
        %v1086 = vmul.f32 %v572, %v724
        %v1087 = vmul.f32 %v573, %v724
        %v1088 = vmul.f32 %v574, %v724
        %v1089 = vmul.f32 %v575, %v724
        %v1090 = vmul.f32 %v576, %v724
        %v1091 = vmul.f32 %v577, %v724
        %v1092 = vmul.f32 %v578, %v724
        %v1093 = vmul.f32 %v579, %v724
        %v1094 = vmul.f32 %v580, %v724
        %v1095 = vmul.f32 %v581, %v724
        %v1096 = vmul.f32 %v582, %v724
        %v1097 = vmul.f32 %v583, %v724
        %v1098 = vmul.f32 %v584, %v724
        %v1099 = vmul.f32 %v585, %v724
        %v1100 = vmul.f32 %v586, %v724
        %v1101 = vmul.f32 %v587, %v724
        %v1102 = vmul.f32 %v588, %v724
        %v1103 = vmul.f32 %v589, %v724
        %v1104 = vmul.f32 %v590, %v724
        %v1105 = vmul.f32 %v591, %v724
        %v1106 = vmul.f32 %v592, %v724
        %v1107 = vmul.f32 %v593, %v724
        %v1108 = vmul.f32 %v594, %v724
        %v1109 = vmul.f32 %v595, %v724
        %v1110 = vmul.f32 %v596, %v724
        %v1111 = vmul.f32 %v597, %v724
        %v1112 = vmul.f32 %v598, %v724
        %v1113 = vmul.f32 %v599, %v724
        %v1114 = vmul.f32 %v600, %v724
        %v1115 = vmul.f32 %v601, %v724
        %v1116 = vmul.f32 %v602, %v724
        %v1117 = vmul.f32 %v603, %v724
        %v1118 = vmul.f32 %v604, %v724
        %v1119 = vmul.f32 %v605, %v724
        %v1120 = vmul.f32 %v606, %v724
        %v1121 = vmul.f32 %v607, %v724
        %v1122 = vmul.f32 %v608, %v724
        %v1123 = vmul.f32 %v609, %v724
        %v1124 = vmul.f32 %v610, %v724
        %v1125 = vmul.f32 %v611, %v724
        %v1126 = vmul.f32 %v612, %v724
        %v1127 = vmul.f32 %v613, %v724
        %v1128 = vmul.f32 %v614, %v724
        %v1129 = vmul.f32 %v615, %v724
        %v1130 = vmul.f32 %v616, %v724
        %v1131 = vmul.f32 %v617, %v724
        %v1132 = vmul.f32 %v618, %v724
        %v1133 = vmul.f32 %v619, %v724
        %v1134 = vmul.f32 %v620, %v724
        %v1135 = vmul.f32 %v621, %v724
        %v1136 = vmul.f32 %v622, %v724
        %v1137 = vmul.f32 %v623, %v724
        %v1138 = vmul.f32 %v624, %v724
        %v1139 = vmul.f32 %v625, %v724
        %v1140 = vmul.f32 %v626, %v724
        %v1141 = vmul.f32 %v627, %v724
        %v1142 = vmul.f32 %v628, %v724
        %v1143 = vmul.f32 %v629, %v724
        %v1144 = vmul.f32 %v630, %v724
        %v1145 = vmul.f32 %v631, %v724
        %v1146 = vmul.f32 %v632, %v724
        %v1147 = vmul.f32 %v633, %v724
        %v1148 = vmul.f32 %v634, %v724
        %v1149 = vmul.f32 %v635, %v724
        %v1150 = vmul.f32 %v636, %v724
        %v1151 = vmul.f32 %v637, %v724
        %v1152 = vmul.f32 %v638, %v724
        %v1153 = vmul.f32 %v639, %v724
        %v1154 = vmul.f32 %v640, %v724
        %v1155 = vmul.f32 %v641, %v724
        %v1156 = vmul.f32 %v642, %v724
        %v1157 = vmul.f32 %v643, %v724
        %v1158 = vmul.f32 %v644, %v724
        %v1159 = vmul.f32 %v645, %v724
        %v1160 = vmul.f32 %v646, %v724
        %v1161 = vmul.f32 %v647, %v724
        %v1162 = vmul.f32 %v648, %v724
        %v1163 = vmul.f32 %v649, %v724
        %v1164 = vmul.f32 %v650, %v724
        %v1165 = vmul.f32 %v651, %v724
        %v1166 = vmul.f32 %v652, %v724
        %v1167 = vmul.f32 %v653, %v724
        %v1168 = vmul.f32 %v654, %v724
        %v1169 = vmul.f32 %v655, %v724
        %v1170 = vmul.f32 %v656, %v724
        %v1171 = vmul.f32 %v657, %v724
        %v1172 = vmul.f32 %v658, %v724
        %v1173 = vmul.f32 %v659, %v724
        %v1174 = vmul.f32 %v660, %v724
        %v1175 = vmul.f32 %v661, %v724
        %v1176 = vmul.f32 %v662, %v724
        %v1177 = vmul.f32 %v663, %v724
        %v1178 = vmul.f32 %v664, %v724
        %v1179 = vmul.f32 %v665, %v724
        %v1180 = vmul.f32 %v666, %v724
        %v1181 = vmul.f32 %v667, %v724
        %v1182 = vmul.f32 %v668, %v724
        %v1183 = vmul.f32 %v669, %v724
        %v1184 = vmul.f32 %v670, %v724
        %v1185 = vmul.f32 %v671, %v724
        %v1186 = vmul.f32 %v672, %v724
        %v1187 = vmul.f32 %v673, %v724
        %v1188 = vmul.f32 %v674, %v724
        %v1189 = vmul.f32 %v675, %v724
        %v1190 = vmul.f32 %v676, %v724
        %v1191 = vmul.f32 %v677, %v724
        %v1192 = vmul.f32 %v678, %v724
        %v1193 = vmul.f32 %v679, %v724
        %v1194 = vmul.f32 %v680, %v724
        %v1195 = vmul.f32 %v681, %v724
        %v1196 = vmul.f32 %v682, %v724
        %v1197 = vmul.f32 %v683, %v724
        %v1198 = vmul.f32 %v684, %v724
        %v1199 = vmul.f32 %v685, %v724
        %v1200 = vmul.f32 %v686, %v724
        %v1201 = vmul.f32 %v687, %v724
        %v1202 = vmul.f32 %v688, %v724
        %v1203 = vmul.f32 %v689, %v724
        %v1204 = vmul.f32 %v690, %v724
        %v1205 = vmul.f32 %v691, %v724
        %v1206 = vmul.f32 %v692, %v724
        %v1207 = vmul.f32 %v693, %v724
        %v1208 = vmul.f32 %v694, %v724
        %v1209 = vmul.f32 %v695, %v724
        %v1210 = vmul.f32 %v696, %v724
        %v1211 = vmul.f32 %v697, %v724
        %v1212 = vmul.f32 %v698, %v724
        %v1213 = vmul.f32 %v699, %v724
        %v1214 = vmul.f32 %v700, %v724
        %v1215 = vmul.f32 %v701, %v724
        %v1216 = vmul.f32 %v702, %v724
        %v1217 = vmul.f32 %v703, %v724
        %v1218 = vmul.f32 %v704, %v724
        %v1219 = vmul.f32 %v705, %v724
        %v1220 = vmul.f32 %v706, %v724
        %v1221 = vmul.f32 %v707, %v724
        %v1222 = vmul.f32 %v708, %v724
        %v1223 = vmul.f32 %v709, %v724
        %v1224 = vmul.f32 %v710, %v724
        %v1225 = vmul.f32 %v711, %v724
        %v1226 = vmul.f32 %v712, %v724
        %v1227 = vmul.f32 %v713, %v724
        %v1228 = vmul.f32 %v714, %v724
        %v1229 = vmul.f32 %v715, %v724
        %v1230 = vmul.f32 %v716, %v724
        %v1231 = vmul.f32 %v717, %v724
        %v1232 = vmul.f32 %v718, %v724
        %v1233 = vmul.f32 %v719, %v724
        %v1234 = vmul.f32 %v720, %v724
        %v1235 = vmul.f32 %v721, %v724
        %v1236 = vmul.f32 %v722, %v724
        %s1237 = sld [smem:[#allocation3]]
        %v1238 = vstv %s1237
        %v1239 = vadd.f32 %v725, %v1238
        %v1240 = vadd.f32 %v726, %v1238
        %v1241 = vadd.f32 %v727, %v1238
        %v1242 = vadd.f32 %v728, %v1238
        %v1243 = vadd.f32 %v729, %v1238
        %v1244 = vadd.f32 %v730, %v1238
        %v1245 = vadd.f32 %v731, %v1238
        %v1246 = vadd.f32 %v732, %v1238
        %v1247 = vadd.f32 %v733, %v1238
        %v1248 = vadd.f32 %v734, %v1238
        %v1249 = vadd.f32 %v735, %v1238
        %v1250 = vadd.f32 %v736, %v1238
        %v1251 = vadd.f32 %v737, %v1238
        %v1252 = vadd.f32 %v738, %v1238
        %v1253 = vadd.f32 %v739, %v1238
        %v1254 = vadd.f32 %v740, %v1238
        %v1255 = vadd.f32 %v741, %v1238
        %v1256 = vadd.f32 %v742, %v1238
        %v1257 = vadd.f32 %v743, %v1238
        %v1258 = vadd.f32 %v744, %v1238
        %v1259 = vadd.f32 %v745, %v1238
        %v1260 = vadd.f32 %v746, %v1238
        %v1261 = vadd.f32 %v747, %v1238
        %v1262 = vadd.f32 %v748, %v1238
        %v1263 = vadd.f32 %v749, %v1238
        %v1264 = vadd.f32 %v750, %v1238
        %v1265 = vadd.f32 %v751, %v1238
        %v1266 = vadd.f32 %v752, %v1238
        %v1267 = vadd.f32 %v753, %v1238
        %v1268 = vadd.f32 %v754, %v1238
        %v1269 = vadd.f32 %v755, %v1238
        %v1270 = vadd.f32 %v756, %v1238
        %v1271 = vadd.f32 %v757, %v1238
        %v1272 = vadd.f32 %v758, %v1238
        %v1273 = vadd.f32 %v759, %v1238
        %v1274 = vadd.f32 %v760, %v1238
        %v1275 = vadd.f32 %v761, %v1238
        %v1276 = vadd.f32 %v762, %v1238
        %v1277 = vadd.f32 %v763, %v1238
        %v1278 = vadd.f32 %v764, %v1238
        %v1279 = vadd.f32 %v765, %v1238
        %v1280 = vadd.f32 %v766, %v1238
        %v1281 = vadd.f32 %v767, %v1238
        %v1282 = vadd.f32 %v768, %v1238
        %v1283 = vadd.f32 %v769, %v1238
        %v1284 = vadd.f32 %v770, %v1238
        %v1285 = vadd.f32 %v771, %v1238
        %v1286 = vadd.f32 %v772, %v1238
        %v1287 = vadd.f32 %v773, %v1238
        %v1288 = vadd.f32 %v774, %v1238
        %v1289 = vadd.f32 %v775, %v1238
        %v1290 = vadd.f32 %v776, %v1238
        %v1291 = vadd.f32 %v777, %v1238
        %v1292 = vadd.f32 %v778, %v1238
        %v1293 = vadd.f32 %v779, %v1238
        %v1294 = vadd.f32 %v780, %v1238
        %v1295 = vadd.f32 %v781, %v1238
        %v1296 = vadd.f32 %v782, %v1238
        %v1297 = vadd.f32 %v783, %v1238
        %v1298 = vadd.f32 %v784, %v1238
        %v1299 = vadd.f32 %v785, %v1238
        %v1300 = vadd.f32 %v786, %v1238
        %v1301 = vadd.f32 %v787, %v1238
        %v1302 = vadd.f32 %v788, %v1238
        %v1303 = vadd.f32 %v789, %v1238
        %v1304 = vadd.f32 %v790, %v1238
        %v1305 = vadd.f32 %v791, %v1238
        %v1306 = vadd.f32 %v792, %v1238
        %v1307 = vadd.f32 %v793, %v1238
        %v1308 = vadd.f32 %v794, %v1238
        %v1309 = vadd.f32 %v795, %v1238
        %v1310 = vadd.f32 %v796, %v1238
        %v1311 = vadd.f32 %v797, %v1238
        %v1312 = vadd.f32 %v798, %v1238
        %v1313 = vadd.f32 %v799, %v1238
        %v1314 = vadd.f32 %v800, %v1238
        %v1315 = vadd.f32 %v801, %v1238
        %v1316 = vadd.f32 %v802, %v1238
        %v1317 = vadd.f32 %v803, %v1238
        %v1318 = vadd.f32 %v804, %v1238
        %v1319 = vadd.f32 %v805, %v1238
        %v1320 = vadd.f32 %v806, %v1238
        %v1321 = vadd.f32 %v807, %v1238
        %v1322 = vadd.f32 %v808, %v1238
        %v1323 = vadd.f32 %v809, %v1238
        %v1324 = vadd.f32 %v810, %v1238
        %v1325 = vadd.f32 %v811, %v1238
        %v1326 = vadd.f32 %v812, %v1238
        %v1327 = vadd.f32 %v813, %v1238
        %v1328 = vadd.f32 %v814, %v1238
        %v1329 = vadd.f32 %v815, %v1238
        %v1330 = vadd.f32 %v816, %v1238
        %v1331 = vadd.f32 %v817, %v1238
        %v1332 = vadd.f32 %v818, %v1238
        %v1333 = vadd.f32 %v819, %v1238
        %v1334 = vadd.f32 %v820, %v1238
        %v1335 = vadd.f32 %v821, %v1238
        %v1336 = vadd.f32 %v822, %v1238
        %v1337 = vadd.f32 %v823, %v1238
        %v1338 = vadd.f32 %v824, %v1238
        %v1339 = vadd.f32 %v825, %v1238
        %v1340 = vadd.f32 %v826, %v1238
        %v1341 = vadd.f32 %v827, %v1238
        %v1342 = vadd.f32 %v828, %v1238
        %v1343 = vadd.f32 %v829, %v1238
        %v1344 = vadd.f32 %v830, %v1238
        %v1345 = vadd.f32 %v831, %v1238
        %v1346 = vadd.f32 %v832, %v1238
        %v1347 = vadd.f32 %v833, %v1238
        %v1348 = vadd.f32 %v834, %v1238
        %v1349 = vadd.f32 %v835, %v1238
        %v1350 = vadd.f32 %v836, %v1238
        %v1351 = vadd.f32 %v837, %v1238
        %v1352 = vadd.f32 %v838, %v1238
        %v1353 = vadd.f32 %v839, %v1238
        %v1354 = vadd.f32 %v840, %v1238
        %v1355 = vadd.f32 %v841, %v1238
        %v1356 = vadd.f32 %v842, %v1238
        %v1357 = vadd.f32 %v843, %v1238
        %v1358 = vadd.f32 %v844, %v1238
        %v1359 = vadd.f32 %v845, %v1238
        %v1360 = vadd.f32 %v846, %v1238
        %v1361 = vadd.f32 %v847, %v1238
        %v1362 = vadd.f32 %v848, %v1238
        %v1363 = vadd.f32 %v849, %v1238
        %v1364 = vadd.f32 %v850, %v1238
        %v1365 = vadd.f32 %v851, %v1238
        %v1366 = vadd.f32 %v852, %v1238
        %v1367 = vadd.f32 %v853, %v1238
        %v1368 = vadd.f32 %v854, %v1238
        %v1369 = vadd.f32 %v855, %v1238
        %v1370 = vadd.f32 %v856, %v1238
        %v1371 = vadd.f32 %v857, %v1238
        %v1372 = vadd.f32 %v858, %v1238
        %v1373 = vadd.f32 %v859, %v1238
        %v1374 = vadd.f32 %v860, %v1238
        %v1375 = vadd.f32 %v861, %v1238
        %v1376 = vadd.f32 %v862, %v1238
        %v1377 = vadd.f32 %v863, %v1238
        %v1378 = vadd.f32 %v864, %v1238
        %v1379 = vadd.f32 %v865, %v1238
        %v1380 = vadd.f32 %v866, %v1238
        %v1381 = vadd.f32 %v867, %v1238
        %v1382 = vadd.f32 %v868, %v1238
        %v1383 = vadd.f32 %v869, %v1238
        %v1384 = vadd.f32 %v870, %v1238
        %v1385 = vadd.f32 %v871, %v1238
        %v1386 = vadd.f32 %v872, %v1238
        %v1387 = vadd.f32 %v873, %v1238
        %v1388 = vadd.f32 %v874, %v1238
        %v1389 = vadd.f32 %v875, %v1238
        %v1390 = vadd.f32 %v876, %v1238
        %v1391 = vadd.f32 %v877, %v1238
        %v1392 = vadd.f32 %v878, %v1238
        %v1393 = vadd.f32 %v879, %v1238
        %v1394 = vadd.f32 %v880, %v1238
        %v1395 = vadd.f32 %v881, %v1238
        %v1396 = vadd.f32 %v882, %v1238
        %v1397 = vadd.f32 %v883, %v1238
        %v1398 = vadd.f32 %v884, %v1238
        %v1399 = vadd.f32 %v885, %v1238
        %v1400 = vadd.f32 %v886, %v1238
        %v1401 = vadd.f32 %v887, %v1238
        %v1402 = vadd.f32 %v888, %v1238
        %v1403 = vadd.f32 %v889, %v1238
        %v1404 = vadd.f32 %v890, %v1238
        %v1405 = vadd.f32 %v891, %v1238
        %v1406 = vadd.f32 %v892, %v1238
        %v1407 = vadd.f32 %v893, %v1238
        %v1408 = vadd.f32 %v894, %v1238
        %v1409 = vadd.f32 %v895, %v1238
        %v1410 = vadd.f32 %v896, %v1238
        %v1411 = vadd.f32 %v897, %v1238
        %v1412 = vadd.f32 %v898, %v1238
        %v1413 = vadd.f32 %v899, %v1238
        %v1414 = vadd.f32 %v900, %v1238
        %v1415 = vadd.f32 %v901, %v1238
        %v1416 = vadd.f32 %v902, %v1238
        %v1417 = vadd.f32 %v903, %v1238
        %v1418 = vadd.f32 %v904, %v1238
        %v1419 = vadd.f32 %v905, %v1238
        %v1420 = vadd.f32 %v906, %v1238
        %v1421 = vadd.f32 %v907, %v1238
        %v1422 = vadd.f32 %v908, %v1238
        %v1423 = vadd.f32 %v909, %v1238
        %v1424 = vadd.f32 %v910, %v1238
        %v1425 = vadd.f32 %v911, %v1238
        %v1426 = vadd.f32 %v912, %v1238
        %v1427 = vadd.f32 %v913, %v1238
        %v1428 = vadd.f32 %v914, %v1238
        %v1429 = vadd.f32 %v915, %v1238
        %v1430 = vadd.f32 %v916, %v1238
        %v1431 = vadd.f32 %v917, %v1238
        %v1432 = vadd.f32 %v918, %v1238
        %v1433 = vadd.f32 %v919, %v1238
        %v1434 = vadd.f32 %v920, %v1238
        %v1435 = vadd.f32 %v921, %v1238
        %v1436 = vadd.f32 %v922, %v1238
        %v1437 = vadd.f32 %v923, %v1238
        %v1438 = vadd.f32 %v924, %v1238
        %v1439 = vadd.f32 %v925, %v1238
        %v1440 = vadd.f32 %v926, %v1238
        %v1441 = vadd.f32 %v927, %v1238
        %v1442 = vadd.f32 %v928, %v1238
        %v1443 = vadd.f32 %v929, %v1238
        %v1444 = vadd.f32 %v930, %v1238
        %v1445 = vadd.f32 %v931, %v1238
        %v1446 = vadd.f32 %v932, %v1238
        %v1447 = vadd.f32 %v933, %v1238
        %v1448 = vadd.f32 %v934, %v1238
        %v1449 = vadd.f32 %v935, %v1238
        %v1450 = vadd.f32 %v936, %v1238
        %v1451 = vadd.f32 %v937, %v1238
        %v1452 = vadd.f32 %v938, %v1238
        %v1453 = vadd.f32 %v939, %v1238
        %v1454 = vadd.f32 %v940, %v1238
        %v1455 = vadd.f32 %v941, %v1238
        %v1456 = vadd.f32 %v942, %v1238
        %v1457 = vadd.f32 %v943, %v1238
        %v1458 = vadd.f32 %v944, %v1238
        %v1459 = vadd.f32 %v945, %v1238
        %v1460 = vadd.f32 %v946, %v1238
        %v1461 = vadd.f32 %v947, %v1238
        %v1462 = vadd.f32 %v948, %v1238
        %v1463 = vadd.f32 %v949, %v1238
        %v1464 = vadd.f32 %v950, %v1238
        %v1465 = vadd.f32 %v951, %v1238
        %v1466 = vadd.f32 %v952, %v1238
        %v1467 = vadd.f32 %v953, %v1238
        %v1468 = vadd.f32 %v954, %v1238
        %v1469 = vadd.f32 %v955, %v1238
        %v1470 = vadd.f32 %v956, %v1238
        %v1471 = vadd.f32 %v957, %v1238
        %v1472 = vadd.f32 %v958, %v1238
        %v1473 = vadd.f32 %v959, %v1238
        %v1474 = vadd.f32 %v960, %v1238
        %v1475 = vadd.f32 %v961, %v1238
        %v1476 = vadd.f32 %v962, %v1238
        %v1477 = vadd.f32 %v963, %v1238
        %v1478 = vadd.f32 %v964, %v1238
        %v1479 = vadd.f32 %v965, %v1238
        %v1480 = vadd.f32 %v966, %v1238
        %v1481 = vadd.f32 %v967, %v1238
        %v1482 = vadd.f32 %v968, %v1238
        %v1483 = vadd.f32 %v969, %v1238
        %v1484 = vadd.f32 %v970, %v1238
        %v1485 = vadd.f32 %v971, %v1238
        %v1486 = vadd.f32 %v972, %v1238
        %v1487 = vadd.f32 %v973, %v1238
        %v1488 = vadd.f32 %v974, %v1238
        %v1489 = vadd.f32 %v975, %v1238
        %v1490 = vadd.f32 %v976, %v1238
        %v1491 = vadd.f32 %v977, %v1238
        %v1492 = vadd.f32 %v978, %v1238
        %v1493 = vadd.f32 %v979, %v1238
        %v1494 = vadd.f32 %v980, %v1238
        %v1495 = vadd.f32 %v981, %v1238
        %v1496 = vadd.f32 %v982, %v1238
        %v1497 = vadd.f32 %v983, %v1238
        %v1498 = vadd.f32 %v984, %v1238
        %v1499 = vadd.f32 %v985, %v1238
        %v1500 = vadd.f32 %v986, %v1238
        %v1501 = vadd.f32 %v987, %v1238
        %v1502 = vadd.f32 %v988, %v1238
        %v1503 = vadd.f32 %v989, %v1238
        %v1504 = vadd.f32 %v990, %v1238
        %v1505 = vadd.f32 %v991, %v1238
        %v1506 = vadd.f32 %v992, %v1238
        %v1507 = vadd.f32 %v993, %v1238
        %v1508 = vadd.f32 %v994, %v1238
        %v1509 = vadd.f32 %v995, %v1238
        %v1510 = vadd.f32 %v996, %v1238
        %v1511 = vadd.f32 %v997, %v1238
        %v1512 = vadd.f32 %v998, %v1238
        %v1513 = vadd.f32 %v999, %v1238
        %v1514 = vadd.f32 %v1000, %v1238
        %v1515 = vadd.f32 %v1001, %v1238
        %v1516 = vadd.f32 %v1002, %v1238
        %v1517 = vadd.f32 %v1003, %v1238
        %v1518 = vadd.f32 %v1004, %v1238
        %v1519 = vadd.f32 %v1005, %v1238
        %v1520 = vadd.f32 %v1006, %v1238
        %v1521 = vadd.f32 %v1007, %v1238
        %v1522 = vadd.f32 %v1008, %v1238
        %v1523 = vadd.f32 %v1009, %v1238
        %v1524 = vadd.f32 %v1010, %v1238
        %v1525 = vadd.f32 %v1011, %v1238
        %v1526 = vadd.f32 %v1012, %v1238
        %v1527 = vadd.f32 %v1013, %v1238
        %v1528 = vadd.f32 %v1014, %v1238
        %v1529 = vadd.f32 %v1015, %v1238
        %v1530 = vadd.f32 %v1016, %v1238
        %v1531 = vadd.f32 %v1017, %v1238
        %v1532 = vadd.f32 %v1018, %v1238
        %v1533 = vadd.f32 %v1019, %v1238
        %v1534 = vadd.f32 %v1020, %v1238
        %v1535 = vadd.f32 %v1021, %v1238
        %v1536 = vadd.f32 %v1022, %v1238
        %v1537 = vadd.f32 %v1023, %v1238
        %v1538 = vadd.f32 %v1024, %v1238
        %v1539 = vadd.f32 %v1025, %v1238
        %v1540 = vadd.f32 %v1026, %v1238
        %v1541 = vadd.f32 %v1027, %v1238
        %v1542 = vadd.f32 %v1028, %v1238
        %v1543 = vadd.f32 %v1029, %v1238
        %v1544 = vadd.f32 %v1030, %v1238
        %v1545 = vadd.f32 %v1031, %v1238
        %v1546 = vadd.f32 %v1032, %v1238
        %v1547 = vadd.f32 %v1033, %v1238
        %v1548 = vadd.f32 %v1034, %v1238
        %v1549 = vadd.f32 %v1035, %v1238
        %v1550 = vadd.f32 %v1036, %v1238
        %v1551 = vadd.f32 %v1037, %v1238
        %v1552 = vadd.f32 %v1038, %v1238
        %v1553 = vadd.f32 %v1039, %v1238
        %v1554 = vadd.f32 %v1040, %v1238
        %v1555 = vadd.f32 %v1041, %v1238
        %v1556 = vadd.f32 %v1042, %v1238
        %v1557 = vadd.f32 %v1043, %v1238
        %v1558 = vadd.f32 %v1044, %v1238
        %v1559 = vadd.f32 %v1045, %v1238
        %v1560 = vadd.f32 %v1046, %v1238
        %v1561 = vadd.f32 %v1047, %v1238
        %v1562 = vadd.f32 %v1048, %v1238
        %v1563 = vadd.f32 %v1049, %v1238
        %v1564 = vadd.f32 %v1050, %v1238
        %v1565 = vadd.f32 %v1051, %v1238
        %v1566 = vadd.f32 %v1052, %v1238
        %v1567 = vadd.f32 %v1053, %v1238
        %v1568 = vadd.f32 %v1054, %v1238
        %v1569 = vadd.f32 %v1055, %v1238
        %v1570 = vadd.f32 %v1056, %v1238
        %v1571 = vadd.f32 %v1057, %v1238
        %v1572 = vadd.f32 %v1058, %v1238
        %v1573 = vadd.f32 %v1059, %v1238
        %v1574 = vadd.f32 %v1060, %v1238
        %v1575 = vadd.f32 %v1061, %v1238
        %v1576 = vadd.f32 %v1062, %v1238
        %v1577 = vadd.f32 %v1063, %v1238
        %v1578 = vadd.f32 %v1064, %v1238
        %v1579 = vadd.f32 %v1065, %v1238
        %v1580 = vadd.f32 %v1066, %v1238
        %v1581 = vadd.f32 %v1067, %v1238
        %v1582 = vadd.f32 %v1068, %v1238
        %v1583 = vadd.f32 %v1069, %v1238
        %v1584 = vadd.f32 %v1070, %v1238
        %v1585 = vadd.f32 %v1071, %v1238
        %v1586 = vadd.f32 %v1072, %v1238
        %v1587 = vadd.f32 %v1073, %v1238
        %v1588 = vadd.f32 %v1074, %v1238
        %v1589 = vadd.f32 %v1075, %v1238
        %v1590 = vadd.f32 %v1076, %v1238
        %v1591 = vadd.f32 %v1077, %v1238
        %v1592 = vadd.f32 %v1078, %v1238
        %v1593 = vadd.f32 %v1079, %v1238
        %v1594 = vadd.f32 %v1080, %v1238
        %v1595 = vadd.f32 %v1081, %v1238
        %v1596 = vadd.f32 %v1082, %v1238
        %v1597 = vadd.f32 %v1083, %v1238
        %v1598 = vadd.f32 %v1084, %v1238
        %v1599 = vadd.f32 %v1085, %v1238
        %v1600 = vadd.f32 %v1086, %v1238
        %v1601 = vadd.f32 %v1087, %v1238
        %v1602 = vadd.f32 %v1088, %v1238
        %v1603 = vadd.f32 %v1089, %v1238
        %v1604 = vadd.f32 %v1090, %v1238
        %v1605 = vadd.f32 %v1091, %v1238
        %v1606 = vadd.f32 %v1092, %v1238
        %v1607 = vadd.f32 %v1093, %v1238
        %v1608 = vadd.f32 %v1094, %v1238
        %v1609 = vadd.f32 %v1095, %v1238
        %v1610 = vadd.f32 %v1096, %v1238
        %v1611 = vadd.f32 %v1097, %v1238
        %v1612 = vadd.f32 %v1098, %v1238
        %v1613 = vadd.f32 %v1099, %v1238
        %v1614 = vadd.f32 %v1100, %v1238
        %v1615 = vadd.f32 %v1101, %v1238
        %v1616 = vadd.f32 %v1102, %v1238
        %v1617 = vadd.f32 %v1103, %v1238
        %v1618 = vadd.f32 %v1104, %v1238
        %v1619 = vadd.f32 %v1105, %v1238
        %v1620 = vadd.f32 %v1106, %v1238
        %v1621 = vadd.f32 %v1107, %v1238
        %v1622 = vadd.f32 %v1108, %v1238
        %v1623 = vadd.f32 %v1109, %v1238
        %v1624 = vadd.f32 %v1110, %v1238
        %v1625 = vadd.f32 %v1111, %v1238
        %v1626 = vadd.f32 %v1112, %v1238
        %v1627 = vadd.f32 %v1113, %v1238
        %v1628 = vadd.f32 %v1114, %v1238
        %v1629 = vadd.f32 %v1115, %v1238
        %v1630 = vadd.f32 %v1116, %v1238
        %v1631 = vadd.f32 %v1117, %v1238
        %v1632 = vadd.f32 %v1118, %v1238
        %v1633 = vadd.f32 %v1119, %v1238
        %v1634 = vadd.f32 %v1120, %v1238
        %v1635 = vadd.f32 %v1121, %v1238
        %v1636 = vadd.f32 %v1122, %v1238
        %v1637 = vadd.f32 %v1123, %v1238
        %v1638 = vadd.f32 %v1124, %v1238
        %v1639 = vadd.f32 %v1125, %v1238
        %v1640 = vadd.f32 %v1126, %v1238
        %v1641 = vadd.f32 %v1127, %v1238
        %v1642 = vadd.f32 %v1128, %v1238
        %v1643 = vadd.f32 %v1129, %v1238
        %v1644 = vadd.f32 %v1130, %v1238
        %v1645 = vadd.f32 %v1131, %v1238
        %v1646 = vadd.f32 %v1132, %v1238
        %v1647 = vadd.f32 %v1133, %v1238
        %v1648 = vadd.f32 %v1134, %v1238
        %v1649 = vadd.f32 %v1135, %v1238
        %v1650 = vadd.f32 %v1136, %v1238
        %v1651 = vadd.f32 %v1137, %v1238
        %v1652 = vadd.f32 %v1138, %v1238
        %v1653 = vadd.f32 %v1139, %v1238
        %v1654 = vadd.f32 %v1140, %v1238
        %v1655 = vadd.f32 %v1141, %v1238
        %v1656 = vadd.f32 %v1142, %v1238
        %v1657 = vadd.f32 %v1143, %v1238
        %v1658 = vadd.f32 %v1144, %v1238
        %v1659 = vadd.f32 %v1145, %v1238
        %v1660 = vadd.f32 %v1146, %v1238
        %v1661 = vadd.f32 %v1147, %v1238
        %v1662 = vadd.f32 %v1148, %v1238
        %v1663 = vadd.f32 %v1149, %v1238
        %v1664 = vadd.f32 %v1150, %v1238
        %v1665 = vadd.f32 %v1151, %v1238
        %v1666 = vadd.f32 %v1152, %v1238
        %v1667 = vadd.f32 %v1153, %v1238
        %v1668 = vadd.f32 %v1154, %v1238
        %v1669 = vadd.f32 %v1155, %v1238
        %v1670 = vadd.f32 %v1156, %v1238
        %v1671 = vadd.f32 %v1157, %v1238
        %v1672 = vadd.f32 %v1158, %v1238
        %v1673 = vadd.f32 %v1159, %v1238
        %v1674 = vadd.f32 %v1160, %v1238
        %v1675 = vadd.f32 %v1161, %v1238
        %v1676 = vadd.f32 %v1162, %v1238
        %v1677 = vadd.f32 %v1163, %v1238
        %v1678 = vadd.f32 %v1164, %v1238
        %v1679 = vadd.f32 %v1165, %v1238
        %v1680 = vadd.f32 %v1166, %v1238
        %v1681 = vadd.f32 %v1167, %v1238
        %v1682 = vadd.f32 %v1168, %v1238
        %v1683 = vadd.f32 %v1169, %v1238
        %v1684 = vadd.f32 %v1170, %v1238
        %v1685 = vadd.f32 %v1171, %v1238
        %v1686 = vadd.f32 %v1172, %v1238
        %v1687 = vadd.f32 %v1173, %v1238
        %v1688 = vadd.f32 %v1174, %v1238
        %v1689 = vadd.f32 %v1175, %v1238
        %v1690 = vadd.f32 %v1176, %v1238
        %v1691 = vadd.f32 %v1177, %v1238
        %v1692 = vadd.f32 %v1178, %v1238
        %v1693 = vadd.f32 %v1179, %v1238
        %v1694 = vadd.f32 %v1180, %v1238
        %v1695 = vadd.f32 %v1181, %v1238
        %v1696 = vadd.f32 %v1182, %v1238
        %v1697 = vadd.f32 %v1183, %v1238
        %v1698 = vadd.f32 %v1184, %v1238
        %v1699 = vadd.f32 %v1185, %v1238
        %v1700 = vadd.f32 %v1186, %v1238
        %v1701 = vadd.f32 %v1187, %v1238
        %v1702 = vadd.f32 %v1188, %v1238
        %v1703 = vadd.f32 %v1189, %v1238
        %v1704 = vadd.f32 %v1190, %v1238
        %v1705 = vadd.f32 %v1191, %v1238
        %v1706 = vadd.f32 %v1192, %v1238
        %v1707 = vadd.f32 %v1193, %v1238
        %v1708 = vadd.f32 %v1194, %v1238
        %v1709 = vadd.f32 %v1195, %v1238
        %v1710 = vadd.f32 %v1196, %v1238
        %v1711 = vadd.f32 %v1197, %v1238
        %v1712 = vadd.f32 %v1198, %v1238
        %v1713 = vadd.f32 %v1199, %v1238
        %v1714 = vadd.f32 %v1200, %v1238
        %v1715 = vadd.f32 %v1201, %v1238
        %v1716 = vadd.f32 %v1202, %v1238
        %v1717 = vadd.f32 %v1203, %v1238
        %v1718 = vadd.f32 %v1204, %v1238
        %v1719 = vadd.f32 %v1205, %v1238
        %v1720 = vadd.f32 %v1206, %v1238
        %v1721 = vadd.f32 %v1207, %v1238
        %v1722 = vadd.f32 %v1208, %v1238
        %v1723 = vadd.f32 %v1209, %v1238
        %v1724 = vadd.f32 %v1210, %v1238
        %v1725 = vadd.f32 %v1211, %v1238
        %v1726 = vadd.f32 %v1212, %v1238
        %v1727 = vadd.f32 %v1213, %v1238
        %v1728 = vadd.f32 %v1214, %v1238
        %v1729 = vadd.f32 %v1215, %v1238
        %v1730 = vadd.f32 %v1216, %v1238
        %v1731 = vadd.f32 %v1217, %v1238
        %v1732 = vadd.f32 %v1218, %v1238
        %v1733 = vadd.f32 %v1219, %v1238
        %v1734 = vadd.f32 %v1220, %v1238
        %v1735 = vadd.f32 %v1221, %v1238
        %v1736 = vadd.f32 %v1222, %v1238
        %v1737 = vadd.f32 %v1223, %v1238
        %v1738 = vadd.f32 %v1224, %v1238
        %v1739 = vadd.f32 %v1225, %v1238
        %v1740 = vadd.f32 %v1226, %v1238
        %v1741 = vadd.f32 %v1227, %v1238
        %v1742 = vadd.f32 %v1228, %v1238
        %v1743 = vadd.f32 %v1229, %v1238
        %v1744 = vadd.f32 %v1230, %v1238
        %v1745 = vadd.f32 %v1231, %v1238
        %v1746 = vadd.f32 %v1232, %v1238
        %v1747 = vadd.f32 %v1233, %v1238
        %v1748 = vadd.f32 %v1234, %v1238
        %v1749 = vadd.f32 %v1235, %v1238
        %v1750 = vadd.f32 %v1236, %v1238
        %1751 = vst [vmem:[%s198] sm:$0xff] %v1239
        %1752 = vst [vmem:[%s198 + $0x8] sm:$0xff] %v1240
        %1753 = vst [vmem:[%s198 + $0x10] sm:$0xff] %v1241
        %1754 = vst [vmem:[%s198 + $0x18] sm:$0xff] %v1242
        %1755 = vst [vmem:[%s198 + $0x20] sm:$0xff] %v1243
        %1756 = vst [vmem:[%s198 + $0x28] sm:$0xff] %v1244
        %1757 = vst [vmem:[%s198 + $0x30] sm:$0xff] %v1245
        %1758 = vst [vmem:[%s198 + $0x38] sm:$0xff] %v1246
        %1759 = vst [vmem:[%s198 + $0x40] sm:$0xff] %v1247
        %1760 = vst [vmem:[%s198 + $0x48] sm:$0xff] %v1248
        %1761 = vst [vmem:[%s198 + $0x50] sm:$0xff] %v1249
        %1762 = vst [vmem:[%s198 + $0x58] sm:$0xff] %v1250
        %1763 = vst [vmem:[%s198 + $0x60] sm:$0xff] %v1251
        %1764 = vst [vmem:[%s198 + $0x68] sm:$0xff] %v1252
        %1765 = vst [vmem:[%s198 + $0x70] sm:$0xff] %v1253
        %1766 = vst [vmem:[%s198 + $0x78] sm:$0xff] %v1254
        %1767 = vst [vmem:[%s198 + $0x80] sm:$0xff] %v1255
        %1768 = vst [vmem:[%s198 + $0x88] sm:$0xff] %v1256
        %1769 = vst [vmem:[%s198 + $0x90] sm:$0xff] %v1257
        %1770 = vst [vmem:[%s198 + $0x98] sm:$0xff] %v1258
        %1771 = vst [vmem:[%s198 + $0xa0] sm:$0xff] %v1259
        %1772 = vst [vmem:[%s198 + $0xa8] sm:$0xff] %v1260
        %1773 = vst [vmem:[%s198 + $0xb0] sm:$0xff] %v1261
        %1774 = vst [vmem:[%s198 + $0xb8] sm:$0xff] %v1262
        %1775 = vst [vmem:[%s198 + $0xc0] sm:$0xff] %v1263
        %1776 = vst [vmem:[%s198 + $0xc8] sm:$0xff] %v1264
        %1777 = vst [vmem:[%s198 + $0xd0] sm:$0xff] %v1265
        %1778 = vst [vmem:[%s198 + $0xd8] sm:$0xff] %v1266
        %1779 = vst [vmem:[%s198 + $0xe0] sm:$0xff] %v1267
        %1780 = vst [vmem:[%s198 + $0xe8] sm:$0xff] %v1268
        %1781 = vst [vmem:[%s198 + $0xf0] sm:$0xff] %v1269
        %1782 = vst [vmem:[%s198 + $0xf8] sm:$0xff] %v1270
        %1783 = vst [vmem:[%s198 + $0x100] sm:$0xff] %v1271
        %1784 = vst [vmem:[%s198 + $0x108] sm:$0xff] %v1272
        %1785 = vst [vmem:[%s198 + $0x110] sm:$0xff] %v1273
        %1786 = vst [vmem:[%s198 + $0x118] sm:$0xff] %v1274
        %1787 = vst [vmem:[%s198 + $0x120] sm:$0xff] %v1275
        %1788 = vst [vmem:[%s198 + $0x128] sm:$0xff] %v1276
        %1789 = vst [vmem:[%s198 + $0x130] sm:$0xff] %v1277
        %1790 = vst [vmem:[%s198 + $0x138] sm:$0xff] %v1278
        %1791 = vst [vmem:[%s198 + $0x140] sm:$0xff] %v1279
        %1792 = vst [vmem:[%s198 + $0x148] sm:$0xff] %v1280
        %1793 = vst [vmem:[%s198 + $0x150] sm:$0xff] %v1281
        %1794 = vst [vmem:[%s198 + $0x158] sm:$0xff] %v1282
        %1795 = vst [vmem:[%s198 + $0x160] sm:$0xff] %v1283
        %1796 = vst [vmem:[%s198 + $0x168] sm:$0xff] %v1284
        %1797 = vst [vmem:[%s198 + $0x170] sm:$0xff] %v1285
        %1798 = vst [vmem:[%s198 + $0x178] sm:$0xff] %v1286
        %1799 = vst [vmem:[%s198 + $0x180] sm:$0xff] %v1287
        %1800 = vst [vmem:[%s198 + $0x188] sm:$0xff] %v1288
        %1801 = vst [vmem:[%s198 + $0x190] sm:$0xff] %v1289
        %1802 = vst [vmem:[%s198 + $0x198] sm:$0xff] %v1290
        %1803 = vst [vmem:[%s198 + $0x1a0] sm:$0xff] %v1291
        %1804 = vst [vmem:[%s198 + $0x1a8] sm:$0xff] %v1292
        %1805 = vst [vmem:[%s198 + $0x1b0] sm:$0xff] %v1293
        %1806 = vst [vmem:[%s198 + $0x1b8] sm:$0xff] %v1294
        %1807 = vst [vmem:[%s198 + $0x1c0] sm:$0xff] %v1295
        %1808 = vst [vmem:[%s198 + $0x1c8] sm:$0xff] %v1296
        %1809 = vst [vmem:[%s198 + $0x1d0] sm:$0xff] %v1297
        %1810 = vst [vmem:[%s198 + $0x1d8] sm:$0xff] %v1298
        %1811 = vst [vmem:[%s198 + $0x1e0] sm:$0xff] %v1299
        %1812 = vst [vmem:[%s198 + $0x1e8] sm:$0xff] %v1300
        %1813 = vst [vmem:[%s198 + $0x1f0] sm:$0xff] %v1301
        %1814 = vst [vmem:[%s198 + $0x1f8] sm:$0xff] %v1302
        %1815 = vst [vmem:[%s198 + $0x200] sm:$0xff] %v1303
        %1816 = vst [vmem:[%s198 + $0x208] sm:$0xff] %v1304
        %1817 = vst [vmem:[%s198 + $0x210] sm:$0xff] %v1305
        %1818 = vst [vmem:[%s198 + $0x218] sm:$0xff] %v1306
        %1819 = vst [vmem:[%s198 + $0x220] sm:$0xff] %v1307
        %1820 = vst [vmem:[%s198 + $0x228] sm:$0xff] %v1308
        %1821 = vst [vmem:[%s198 + $0x230] sm:$0xff] %v1309
        %1822 = vst [vmem:[%s198 + $0x238] sm:$0xff] %v1310
        %1823 = vst [vmem:[%s198 + $0x240] sm:$0xff] %v1311
        %1824 = vst [vmem:[%s198 + $0x248] sm:$0xff] %v1312
        %1825 = vst [vmem:[%s198 + $0x250] sm:$0xff] %v1313
        %1826 = vst [vmem:[%s198 + $0x258] sm:$0xff] %v1314
        %1827 = vst [vmem:[%s198 + $0x260] sm:$0xff] %v1315
        %1828 = vst [vmem:[%s198 + $0x268] sm:$0xff] %v1316
        %1829 = vst [vmem:[%s198 + $0x270] sm:$0xff] %v1317
        %1830 = vst [vmem:[%s198 + $0x278] sm:$0xff] %v1318
        %1831 = vst [vmem:[%s198 + $0x280] sm:$0xff] %v1319
        %1832 = vst [vmem:[%s198 + $0x288] sm:$0xff] %v1320
        %1833 = vst [vmem:[%s198 + $0x290] sm:$0xff] %v1321
        %1834 = vst [vmem:[%s198 + $0x298] sm:$0xff] %v1322
        %1835 = vst [vmem:[%s198 + $0x2a0] sm:$0xff] %v1323
        %1836 = vst [vmem:[%s198 + $0x2a8] sm:$0xff] %v1324
        %1837 = vst [vmem:[%s198 + $0x2b0] sm:$0xff] %v1325
        %1838 = vst [vmem:[%s198 + $0x2b8] sm:$0xff] %v1326
        %1839 = vst [vmem:[%s198 + $0x2c0] sm:$0xff] %v1327
        %1840 = vst [vmem:[%s198 + $0x2c8] sm:$0xff] %v1328
        %1841 = vst [vmem:[%s198 + $0x2d0] sm:$0xff] %v1329
        %1842 = vst [vmem:[%s198 + $0x2d8] sm:$0xff] %v1330
        %1843 = vst [vmem:[%s198 + $0x2e0] sm:$0xff] %v1331
        %1844 = vst [vmem:[%s198 + $0x2e8] sm:$0xff] %v1332
        %1845 = vst [vmem:[%s198 + $0x2f0] sm:$0xff] %v1333
        %1846 = vst [vmem:[%s198 + $0x2f8] sm:$0xff] %v1334
        %1847 = vst [vmem:[%s198 + $0x300] sm:$0xff] %v1335
        %1848 = vst [vmem:[%s198 + $0x308] sm:$0xff] %v1336
        %1849 = vst [vmem:[%s198 + $0x310] sm:$0xff] %v1337
        %1850 = vst [vmem:[%s198 + $0x318] sm:$0xff] %v1338
        %1851 = vst [vmem:[%s198 + $0x320] sm:$0xff] %v1339
        %1852 = vst [vmem:[%s198 + $0x328] sm:$0xff] %v1340
        %1853 = vst [vmem:[%s198 + $0x330] sm:$0xff] %v1341
        %1854 = vst [vmem:[%s198 + $0x338] sm:$0xff] %v1342
        %1855 = vst [vmem:[%s198 + $0x340] sm:$0xff] %v1343
        %1856 = vst [vmem:[%s198 + $0x348] sm:$0xff] %v1344
        %1857 = vst [vmem:[%s198 + $0x350] sm:$0xff] %v1345
        %1858 = vst [vmem:[%s198 + $0x358] sm:$0xff] %v1346
        %1859 = vst [vmem:[%s198 + $0x360] sm:$0xff] %v1347
        %1860 = vst [vmem:[%s198 + $0x368] sm:$0xff] %v1348
        %1861 = vst [vmem:[%s198 + $0x370] sm:$0xff] %v1349
        %1862 = vst [vmem:[%s198 + $0x378] sm:$0xff] %v1350
        %1863 = vst [vmem:[%s198 + $0x380] sm:$0xff] %v1351
        %1864 = vst [vmem:[%s198 + $0x388] sm:$0xff] %v1352
        %1865 = vst [vmem:[%s198 + $0x390] sm:$0xff] %v1353
        %1866 = vst [vmem:[%s198 + $0x398] sm:$0xff] %v1354
        %1867 = vst [vmem:[%s198 + $0x3a0] sm:$0xff] %v1355
        %1868 = vst [vmem:[%s198 + $0x3a8] sm:$0xff] %v1356
        %1869 = vst [vmem:[%s198 + $0x3b0] sm:$0xff] %v1357
        %1870 = vst [vmem:[%s198 + $0x3b8] sm:$0xff] %v1358
        %1871 = vst [vmem:[%s198 + $0x3c0] sm:$0xff] %v1359
        %1872 = vst [vmem:[%s198 + $0x3c8] sm:$0xff] %v1360
        %1873 = vst [vmem:[%s198 + $0x3d0] sm:$0xff] %v1361
        %1874 = vst [vmem:[%s198 + $0x3d8] sm:$0xff] %v1362
        %1875 = vst [vmem:[%s198 + $0x3e0] sm:$0xff] %v1363
        %1876 = vst [vmem:[%s198 + $0x3e8] sm:$0xff] %v1364
        %1877 = vst [vmem:[%s198 + $0x3f0] sm:$0xff] %v1365
        %1878 = vst [vmem:[%s198 + $0x3f8] sm:$0xff] %v1366
        %1879 = vst [vmem:[%s198 + $0x400] sm:$0xff] %v1367
        %1880 = vst [vmem:[%s198 + $0x408] sm:$0xff] %v1368
        %1881 = vst [vmem:[%s198 + $0x410] sm:$0xff] %v1369
        %1882 = vst [vmem:[%s198 + $0x418] sm:$0xff] %v1370
        %1883 = vst [vmem:[%s198 + $0x420] sm:$0xff] %v1371
        %1884 = vst [vmem:[%s198 + $0x428] sm:$0xff] %v1372
        %1885 = vst [vmem:[%s198 + $0x430] sm:$0xff] %v1373
        %1886 = vst [vmem:[%s198 + $0x438] sm:$0xff] %v1374
        %1887 = vst [vmem:[%s198 + $0x440] sm:$0xff] %v1375
        %1888 = vst [vmem:[%s198 + $0x448] sm:$0xff] %v1376
        %1889 = vst [vmem:[%s198 + $0x450] sm:$0xff] %v1377
        %1890 = vst [vmem:[%s198 + $0x458] sm:$0xff] %v1378
        %1891 = vst [vmem:[%s198 + $0x460] sm:$0xff] %v1379
        %1892 = vst [vmem:[%s198 + $0x468] sm:$0xff] %v1380
        %1893 = vst [vmem:[%s198 + $0x470] sm:$0xff] %v1381
        %1894 = vst [vmem:[%s198 + $0x478] sm:$0xff] %v1382
        %1895 = vst [vmem:[%s198 + $0x480] sm:$0xff] %v1383
        %1896 = vst [vmem:[%s198 + $0x488] sm:$0xff] %v1384
        %1897 = vst [vmem:[%s198 + $0x490] sm:$0xff] %v1385
        %1898 = vst [vmem:[%s198 + $0x498] sm:$0xff] %v1386
        %1899 = vst [vmem:[%s198 + $0x4a0] sm:$0xff] %v1387
        %1900 = vst [vmem:[%s198 + $0x4a8] sm:$0xff] %v1388
        %1901 = vst [vmem:[%s198 + $0x4b0] sm:$0xff] %v1389
        %1902 = vst [vmem:[%s198 + $0x4b8] sm:$0xff] %v1390
        %1903 = vst [vmem:[%s198 + $0x4c0] sm:$0xff] %v1391
        %1904 = vst [vmem:[%s198 + $0x4c8] sm:$0xff] %v1392
        %1905 = vst [vmem:[%s198 + $0x4d0] sm:$0xff] %v1393
        %1906 = vst [vmem:[%s198 + $0x4d8] sm:$0xff] %v1394
        %1907 = vst [vmem:[%s198 + $0x4e0] sm:$0xff] %v1395
        %1908 = vst [vmem:[%s198 + $0x4e8] sm:$0xff] %v1396
        %1909 = vst [vmem:[%s198 + $0x4f0] sm:$0xff] %v1397
        %1910 = vst [vmem:[%s198 + $0x4f8] sm:$0xff] %v1398
        %1911 = vst [vmem:[%s198 + $0x500] sm:$0xff] %v1399
        %1912 = vst [vmem:[%s198 + $0x508] sm:$0xff] %v1400
        %1913 = vst [vmem:[%s198 + $0x510] sm:$0xff] %v1401
        %1914 = vst [vmem:[%s198 + $0x518] sm:$0xff] %v1402
        %1915 = vst [vmem:[%s198 + $0x520] sm:$0xff] %v1403
        %1916 = vst [vmem:[%s198 + $0x528] sm:$0xff] %v1404
        %1917 = vst [vmem:[%s198 + $0x530] sm:$0xff] %v1405
        %1918 = vst [vmem:[%s198 + $0x538] sm:$0xff] %v1406
        %1919 = vst [vmem:[%s198 + $0x540] sm:$0xff] %v1407
        %1920 = vst [vmem:[%s198 + $0x548] sm:$0xff] %v1408
        %1921 = vst [vmem:[%s198 + $0x550] sm:$0xff] %v1409
        %1922 = vst [vmem:[%s198 + $0x558] sm:$0xff] %v1410
        %1923 = vst [vmem:[%s198 + $0x560] sm:$0xff] %v1411
        %1924 = vst [vmem:[%s198 + $0x568] sm:$0xff] %v1412
        %1925 = vst [vmem:[%s198 + $0x570] sm:$0xff] %v1413
        %1926 = vst [vmem:[%s198 + $0x578] sm:$0xff] %v1414
        %1927 = vst [vmem:[%s198 + $0x580] sm:$0xff] %v1415
        %1928 = vst [vmem:[%s198 + $0x588] sm:$0xff] %v1416
        %1929 = vst [vmem:[%s198 + $0x590] sm:$0xff] %v1417
        %1930 = vst [vmem:[%s198 + $0x598] sm:$0xff] %v1418
        %1931 = vst [vmem:[%s198 + $0x5a0] sm:$0xff] %v1419
        %1932 = vst [vmem:[%s198 + $0x5a8] sm:$0xff] %v1420
        %1933 = vst [vmem:[%s198 + $0x5b0] sm:$0xff] %v1421
        %1934 = vst [vmem:[%s198 + $0x5b8] sm:$0xff] %v1422
        %1935 = vst [vmem:[%s198 + $0x5c0] sm:$0xff] %v1423
        %1936 = vst [vmem:[%s198 + $0x5c8] sm:$0xff] %v1424
        %1937 = vst [vmem:[%s198 + $0x5d0] sm:$0xff] %v1425
        %1938 = vst [vmem:[%s198 + $0x5d8] sm:$0xff] %v1426
        %1939 = vst [vmem:[%s198 + $0x5e0] sm:$0xff] %v1427
        %1940 = vst [vmem:[%s198 + $0x5e8] sm:$0xff] %v1428
        %1941 = vst [vmem:[%s198 + $0x5f0] sm:$0xff] %v1429
        %1942 = vst [vmem:[%s198 + $0x5f8] sm:$0xff] %v1430
        %1943 = vst [vmem:[%s198 + $0x600] sm:$0xff] %v1431
        %1944 = vst [vmem:[%s198 + $0x608] sm:$0xff] %v1432
        %1945 = vst [vmem:[%s198 + $0x610] sm:$0xff] %v1433
        %1946 = vst [vmem:[%s198 + $0x618] sm:$0xff] %v1434
        %1947 = vst [vmem:[%s198 + $0x620] sm:$0xff] %v1435
        %1948 = vst [vmem:[%s198 + $0x628] sm:$0xff] %v1436
        %1949 = vst [vmem:[%s198 + $0x630] sm:$0xff] %v1437
        %1950 = vst [vmem:[%s198 + $0x638] sm:$0xff] %v1438
        %1951 = vst [vmem:[%s198 + $0x640] sm:$0xff] %v1439
        %1952 = vst [vmem:[%s198 + $0x648] sm:$0xff] %v1440
        %1953 = vst [vmem:[%s198 + $0x650] sm:$0xff] %v1441
        %1954 = vst [vmem:[%s198 + $0x658] sm:$0xff] %v1442
        %1955 = vst [vmem:[%s198 + $0x660] sm:$0xff] %v1443
        %1956 = vst [vmem:[%s198 + $0x668] sm:$0xff] %v1444
        %1957 = vst [vmem:[%s198 + $0x670] sm:$0xff] %v1445
        %1958 = vst [vmem:[%s198 + $0x678] sm:$0xff] %v1446
        %1959 = vst [vmem:[%s198 + $0x680] sm:$0xff] %v1447
        %1960 = vst [vmem:[%s198 + $0x688] sm:$0xff] %v1448
        %1961 = vst [vmem:[%s198 + $0x690] sm:$0xff] %v1449
        %1962 = vst [vmem:[%s198 + $0x698] sm:$0xff] %v1450
        %1963 = vst [vmem:[%s198 + $0x6a0] sm:$0xff] %v1451
        %1964 = vst [vmem:[%s198 + $0x6a8] sm:$0xff] %v1452
        %1965 = vst [vmem:[%s198 + $0x6b0] sm:$0xff] %v1453
        %1966 = vst [vmem:[%s198 + $0x6b8] sm:$0xff] %v1454
        %1967 = vst [vmem:[%s198 + $0x6c0] sm:$0xff] %v1455
        %1968 = vst [vmem:[%s198 + $0x6c8] sm:$0xff] %v1456
        %1969 = vst [vmem:[%s198 + $0x6d0] sm:$0xff] %v1457
        %1970 = vst [vmem:[%s198 + $0x6d8] sm:$0xff] %v1458
        %1971 = vst [vmem:[%s198 + $0x6e0] sm:$0xff] %v1459
        %1972 = vst [vmem:[%s198 + $0x6e8] sm:$0xff] %v1460
        %1973 = vst [vmem:[%s198 + $0x6f0] sm:$0xff] %v1461
        %1974 = vst [vmem:[%s198 + $0x6f8] sm:$0xff] %v1462
        %1975 = vst [vmem:[%s198 + $0x700] sm:$0xff] %v1463
        %1976 = vst [vmem:[%s198 + $0x708] sm:$0xff] %v1464
        %1977 = vst [vmem:[%s198 + $0x710] sm:$0xff] %v1465
        %1978 = vst [vmem:[%s198 + $0x718] sm:$0xff] %v1466
        %1979 = vst [vmem:[%s198 + $0x720] sm:$0xff] %v1467
        %1980 = vst [vmem:[%s198 + $0x728] sm:$0xff] %v1468
        %1981 = vst [vmem:[%s198 + $0x730] sm:$0xff] %v1469
        %1982 = vst [vmem:[%s198 + $0x738] sm:$0xff] %v1470
        %1983 = vst [vmem:[%s198 + $0x740] sm:$0xff] %v1471
        %1984 = vst [vmem:[%s198 + $0x748] sm:$0xff] %v1472
        %1985 = vst [vmem:[%s198 + $0x750] sm:$0xff] %v1473
        %1986 = vst [vmem:[%s198 + $0x758] sm:$0xff] %v1474
        %1987 = vst [vmem:[%s198 + $0x760] sm:$0xff] %v1475
        %1988 = vst [vmem:[%s198 + $0x768] sm:$0xff] %v1476
        %1989 = vst [vmem:[%s198 + $0x770] sm:$0xff] %v1477
        %1990 = vst [vmem:[%s198 + $0x778] sm:$0xff] %v1478
        %1991 = vst [vmem:[%s198 + $0x780] sm:$0xff] %v1479
        %1992 = vst [vmem:[%s198 + $0x788] sm:$0xff] %v1480
        %1993 = vst [vmem:[%s198 + $0x790] sm:$0xff] %v1481
        %1994 = vst [vmem:[%s198 + $0x798] sm:$0xff] %v1482
        %1995 = vst [vmem:[%s198 + $0x7a0] sm:$0xff] %v1483
        %1996 = vst [vmem:[%s198 + $0x7a8] sm:$0xff] %v1484
        %1997 = vst [vmem:[%s198 + $0x7b0] sm:$0xff] %v1485
        %1998 = vst [vmem:[%s198 + $0x7b8] sm:$0xff] %v1486
        %1999 = vst [vmem:[%s198 + $0x7c0] sm:$0xff] %v1487
        %2000 = vst [vmem:[%s198 + $0x7c8] sm:$0xff] %v1488
        %2001 = vst [vmem:[%s198 + $0x7d0] sm:$0xff] %v1489
        %2002 = vst [vmem:[%s198 + $0x7d8] sm:$0xff] %v1490
        %2003 = vst [vmem:[%s198 + $0x7e0] sm:$0xff] %v1491
        %2004 = vst [vmem:[%s198 + $0x7e8] sm:$0xff] %v1492
        %2005 = vst [vmem:[%s198 + $0x7f0] sm:$0xff] %v1493
        %2006 = vst [vmem:[%s198 + $0x7f8] sm:$0xff] %v1494
        %2007 = vst [vmem:[%s198 + $0x800] sm:$0xff] %v1495
        %2008 = vst [vmem:[%s198 + $0x808] sm:$0xff] %v1496
        %2009 = vst [vmem:[%s198 + $0x810] sm:$0xff] %v1497
        %2010 = vst [vmem:[%s198 + $0x818] sm:$0xff] %v1498
        %2011 = vst [vmem:[%s198 + $0x820] sm:$0xff] %v1499
        %2012 = vst [vmem:[%s198 + $0x828] sm:$0xff] %v1500
        %2013 = vst [vmem:[%s198 + $0x830] sm:$0xff] %v1501
        %2014 = vst [vmem:[%s198 + $0x838] sm:$0xff] %v1502
        %2015 = vst [vmem:[%s198 + $0x840] sm:$0xff] %v1503
        %2016 = vst [vmem:[%s198 + $0x848] sm:$0xff] %v1504
        %2017 = vst [vmem:[%s198 + $0x850] sm:$0xff] %v1505
        %2018 = vst [vmem:[%s198 + $0x858] sm:$0xff] %v1506
        %2019 = vst [vmem:[%s198 + $0x860] sm:$0xff] %v1507
        %2020 = vst [vmem:[%s198 + $0x868] sm:$0xff] %v1508
        %2021 = vst [vmem:[%s198 + $0x870] sm:$0xff] %v1509
        %2022 = vst [vmem:[%s198 + $0x878] sm:$0xff] %v1510
        %2023 = vst [vmem:[%s198 + $0x880] sm:$0xff] %v1511
        %2024 = vst [vmem:[%s198 + $0x888] sm:$0xff] %v1512
        %2025 = vst [vmem:[%s198 + $0x890] sm:$0xff] %v1513
        %2026 = vst [vmem:[%s198 + $0x898] sm:$0xff] %v1514
        %2027 = vst [vmem:[%s198 + $0x8a0] sm:$0xff] %v1515
        %2028 = vst [vmem:[%s198 + $0x8a8] sm:$0xff] %v1516
        %2029 = vst [vmem:[%s198 + $0x8b0] sm:$0xff] %v1517
        %2030 = vst [vmem:[%s198 + $0x8b8] sm:$0xff] %v1518
        %2031 = vst [vmem:[%s198 + $0x8c0] sm:$0xff] %v1519
        %2032 = vst [vmem:[%s198 + $0x8c8] sm:$0xff] %v1520
        %2033 = vst [vmem:[%s198 + $0x8d0] sm:$0xff] %v1521
        %2034 = vst [vmem:[%s198 + $0x8d8] sm:$0xff] %v1522
        %2035 = vst [vmem:[%s198 + $0x8e0] sm:$0xff] %v1523
        %2036 = vst [vmem:[%s198 + $0x8e8] sm:$0xff] %v1524
        %2037 = vst [vmem:[%s198 + $0x8f0] sm:$0xff] %v1525
        %2038 = vst [vmem:[%s198 + $0x8f8] sm:$0xff] %v1526
        %2039 = vst [vmem:[%s198 + $0x900] sm:$0xff] %v1527
        %2040 = vst [vmem:[%s198 + $0x908] sm:$0xff] %v1528
        %2041 = vst [vmem:[%s198 + $0x910] sm:$0xff] %v1529
        %2042 = vst [vmem:[%s198 + $0x918] sm:$0xff] %v1530
        %2043 = vst [vmem:[%s198 + $0x920] sm:$0xff] %v1531
        %2044 = vst [vmem:[%s198 + $0x928] sm:$0xff] %v1532
        %2045 = vst [vmem:[%s198 + $0x930] sm:$0xff] %v1533
        %2046 = vst [vmem:[%s198 + $0x938] sm:$0xff] %v1534
        %2047 = vst [vmem:[%s198 + $0x940] sm:$0xff] %v1535
        %2048 = vst [vmem:[%s198 + $0x948] sm:$0xff] %v1536
        %2049 = vst [vmem:[%s198 + $0x950] sm:$0xff] %v1537
        %2050 = vst [vmem:[%s198 + $0x958] sm:$0xff] %v1538
        %2051 = vst [vmem:[%s198 + $0x960] sm:$0xff] %v1539
        %2052 = vst [vmem:[%s198 + $0x968] sm:$0xff] %v1540
        %2053 = vst [vmem:[%s198 + $0x970] sm:$0xff] %v1541
        %2054 = vst [vmem:[%s198 + $0x978] sm:$0xff] %v1542
        %2055 = vst [vmem:[%s198 + $0x980] sm:$0xff] %v1543
        %2056 = vst [vmem:[%s198 + $0x988] sm:$0xff] %v1544
        %2057 = vst [vmem:[%s198 + $0x990] sm:$0xff] %v1545
        %2058 = vst [vmem:[%s198 + $0x998] sm:$0xff] %v1546
        %2059 = vst [vmem:[%s198 + $0x9a0] sm:$0xff] %v1547
        %2060 = vst [vmem:[%s198 + $0x9a8] sm:$0xff] %v1548
        %2061 = vst [vmem:[%s198 + $0x9b0] sm:$0xff] %v1549
        %2062 = vst [vmem:[%s198 + $0x9b8] sm:$0xff] %v1550
        %2063 = vst [vmem:[%s198 + $0x9c0] sm:$0xff] %v1551
        %2064 = vst [vmem:[%s198 + $0x9c8] sm:$0xff] %v1552
        %2065 = vst [vmem:[%s198 + $0x9d0] sm:$0xff] %v1553
        %2066 = vst [vmem:[%s198 + $0x9d8] sm:$0xff] %v1554
        %2067 = vst [vmem:[%s198 + $0x9e0] sm:$0xff] %v1555
        %2068 = vst [vmem:[%s198 + $0x9e8] sm:$0xff] %v1556
        %2069 = vst [vmem:[%s198 + $0x9f0] sm:$0xff] %v1557
        %2070 = vst [vmem:[%s198 + $0x9f8] sm:$0xff] %v1558
        %2071 = vst [vmem:[%s198 + $0xa00] sm:$0xff] %v1559
        %2072 = vst [vmem:[%s198 + $0xa08] sm:$0xff] %v1560
        %2073 = vst [vmem:[%s198 + $0xa10] sm:$0xff] %v1561
        %2074 = vst [vmem:[%s198 + $0xa18] sm:$0xff] %v1562
        %2075 = vst [vmem:[%s198 + $0xa20] sm:$0xff] %v1563
        %2076 = vst [vmem:[%s198 + $0xa28] sm:$0xff] %v1564
        %2077 = vst [vmem:[%s198 + $0xa30] sm:$0xff] %v1565
        %2078 = vst [vmem:[%s198 + $0xa38] sm:$0xff] %v1566
        %2079 = vst [vmem:[%s198 + $0xa40] sm:$0xff] %v1567
        %2080 = vst [vmem:[%s198 + $0xa48] sm:$0xff] %v1568
        %2081 = vst [vmem:[%s198 + $0xa50] sm:$0xff] %v1569
        %2082 = vst [vmem:[%s198 + $0xa58] sm:$0xff] %v1570
        %2083 = vst [vmem:[%s198 + $0xa60] sm:$0xff] %v1571
        %2084 = vst [vmem:[%s198 + $0xa68] sm:$0xff] %v1572
        %2085 = vst [vmem:[%s198 + $0xa70] sm:$0xff] %v1573
        %2086 = vst [vmem:[%s198 + $0xa78] sm:$0xff] %v1574
        %2087 = vst [vmem:[%s198 + $0xa80] sm:$0xff] %v1575
        %2088 = vst [vmem:[%s198 + $0xa88] sm:$0xff] %v1576
        %2089 = vst [vmem:[%s198 + $0xa90] sm:$0xff] %v1577
        %2090 = vst [vmem:[%s198 + $0xa98] sm:$0xff] %v1578
        %2091 = vst [vmem:[%s198 + $0xaa0] sm:$0xff] %v1579
        %2092 = vst [vmem:[%s198 + $0xaa8] sm:$0xff] %v1580
        %2093 = vst [vmem:[%s198 + $0xab0] sm:$0xff] %v1581
        %2094 = vst [vmem:[%s198 + $0xab8] sm:$0xff] %v1582
        %2095 = vst [vmem:[%s198 + $0xac0] sm:$0xff] %v1583
        %2096 = vst [vmem:[%s198 + $0xac8] sm:$0xff] %v1584
        %2097 = vst [vmem:[%s198 + $0xad0] sm:$0xff] %v1585
        %2098 = vst [vmem:[%s198 + $0xad8] sm:$0xff] %v1586
        %2099 = vst [vmem:[%s198 + $0xae0] sm:$0xff] %v1587
        %2100 = vst [vmem:[%s198 + $0xae8] sm:$0xff] %v1588
        %2101 = vst [vmem:[%s198 + $0xaf0] sm:$0xff] %v1589
        %2102 = vst [vmem:[%s198 + $0xaf8] sm:$0xff] %v1590
        %2103 = vst [vmem:[%s198 + $0xb00] sm:$0xff] %v1591
        %2104 = vst [vmem:[%s198 + $0xb08] sm:$0xff] %v1592
        %2105 = vst [vmem:[%s198 + $0xb10] sm:$0xff] %v1593
        %2106 = vst [vmem:[%s198 + $0xb18] sm:$0xff] %v1594
        %2107 = vst [vmem:[%s198 + $0xb20] sm:$0xff] %v1595
        %2108 = vst [vmem:[%s198 + $0xb28] sm:$0xff] %v1596
        %2109 = vst [vmem:[%s198 + $0xb30] sm:$0xff] %v1597
        %2110 = vst [vmem:[%s198 + $0xb38] sm:$0xff] %v1598
        %2111 = vst [vmem:[%s198 + $0xb40] sm:$0xff] %v1599
        %2112 = vst [vmem:[%s198 + $0xb48] sm:$0xff] %v1600
        %2113 = vst [vmem:[%s198 + $0xb50] sm:$0xff] %v1601
        %2114 = vst [vmem:[%s198 + $0xb58] sm:$0xff] %v1602
        %2115 = vst [vmem:[%s198 + $0xb60] sm:$0xff] %v1603
        %2116 = vst [vmem:[%s198 + $0xb68] sm:$0xff] %v1604
        %2117 = vst [vmem:[%s198 + $0xb70] sm:$0xff] %v1605
        %2118 = vst [vmem:[%s198 + $0xb78] sm:$0xff] %v1606
        %2119 = vst [vmem:[%s198 + $0xb80] sm:$0xff] %v1607
        %2120 = vst [vmem:[%s198 + $0xb88] sm:$0xff] %v1608
        %2121 = vst [vmem:[%s198 + $0xb90] sm:$0xff] %v1609
        %2122 = vst [vmem:[%s198 + $0xb98] sm:$0xff] %v1610
        %2123 = vst [vmem:[%s198 + $0xba0] sm:$0xff] %v1611
        %2124 = vst [vmem:[%s198 + $0xba8] sm:$0xff] %v1612
        %2125 = vst [vmem:[%s198 + $0xbb0] sm:$0xff] %v1613
        %2126 = vst [vmem:[%s198 + $0xbb8] sm:$0xff] %v1614
        %2127 = vst [vmem:[%s198 + $0xbc0] sm:$0xff] %v1615
        %2128 = vst [vmem:[%s198 + $0xbc8] sm:$0xff] %v1616
        %2129 = vst [vmem:[%s198 + $0xbd0] sm:$0xff] %v1617
        %2130 = vst [vmem:[%s198 + $0xbd8] sm:$0xff] %v1618
        %2131 = vst [vmem:[%s198 + $0xbe0] sm:$0xff] %v1619
        %2132 = vst [vmem:[%s198 + $0xbe8] sm:$0xff] %v1620
        %2133 = vst [vmem:[%s198 + $0xbf0] sm:$0xff] %v1621
        %2134 = vst [vmem:[%s198 + $0xbf8] sm:$0xff] %v1622
        %2135 = vst [vmem:[%s198 + $0xc00] sm:$0xff] %v1623
        %2136 = vst [vmem:[%s198 + $0xc08] sm:$0xff] %v1624
        %2137 = vst [vmem:[%s198 + $0xc10] sm:$0xff] %v1625
        %2138 = vst [vmem:[%s198 + $0xc18] sm:$0xff] %v1626
        %2139 = vst [vmem:[%s198 + $0xc20] sm:$0xff] %v1627
        %2140 = vst [vmem:[%s198 + $0xc28] sm:$0xff] %v1628
        %2141 = vst [vmem:[%s198 + $0xc30] sm:$0xff] %v1629
        %2142 = vst [vmem:[%s198 + $0xc38] sm:$0xff] %v1630
        %2143 = vst [vmem:[%s198 + $0xc40] sm:$0xff] %v1631
        %2144 = vst [vmem:[%s198 + $0xc48] sm:$0xff] %v1632
        %2145 = vst [vmem:[%s198 + $0xc50] sm:$0xff] %v1633
        %2146 = vst [vmem:[%s198 + $0xc58] sm:$0xff] %v1634
        %2147 = vst [vmem:[%s198 + $0xc60] sm:$0xff] %v1635
        %2148 = vst [vmem:[%s198 + $0xc68] sm:$0xff] %v1636
        %2149 = vst [vmem:[%s198 + $0xc70] sm:$0xff] %v1637
        %2150 = vst [vmem:[%s198 + $0xc78] sm:$0xff] %v1638
        %2151 = vst [vmem:[%s198 + $0xc80] sm:$0xff] %v1639
        %2152 = vst [vmem:[%s198 + $0xc88] sm:$0xff] %v1640
        %2153 = vst [vmem:[%s198 + $0xc90] sm:$0xff] %v1641
        %2154 = vst [vmem:[%s198 + $0xc98] sm:$0xff] %v1642
        %2155 = vst [vmem:[%s198 + $0xca0] sm:$0xff] %v1643
        %2156 = vst [vmem:[%s198 + $0xca8] sm:$0xff] %v1644
        %2157 = vst [vmem:[%s198 + $0xcb0] sm:$0xff] %v1645
        %2158 = vst [vmem:[%s198 + $0xcb8] sm:$0xff] %v1646
        %2159 = vst [vmem:[%s198 + $0xcc0] sm:$0xff] %v1647
        %2160 = vst [vmem:[%s198 + $0xcc8] sm:$0xff] %v1648
        %2161 = vst [vmem:[%s198 + $0xcd0] sm:$0xff] %v1649
        %2162 = vst [vmem:[%s198 + $0xcd8] sm:$0xff] %v1650
        %2163 = vst [vmem:[%s198 + $0xce0] sm:$0xff] %v1651
        %2164 = vst [vmem:[%s198 + $0xce8] sm:$0xff] %v1652
        %2165 = vst [vmem:[%s198 + $0xcf0] sm:$0xff] %v1653
        %2166 = vst [vmem:[%s198 + $0xcf8] sm:$0xff] %v1654
        %2167 = vst [vmem:[%s198 + $0xd00] sm:$0xff] %v1655
        %2168 = vst [vmem:[%s198 + $0xd08] sm:$0xff] %v1656
        %2169 = vst [vmem:[%s198 + $0xd10] sm:$0xff] %v1657
        %2170 = vst [vmem:[%s198 + $0xd18] sm:$0xff] %v1658
        %2171 = vst [vmem:[%s198 + $0xd20] sm:$0xff] %v1659
        %2172 = vst [vmem:[%s198 + $0xd28] sm:$0xff] %v1660
        %2173 = vst [vmem:[%s198 + $0xd30] sm:$0xff] %v1661
        %2174 = vst [vmem:[%s198 + $0xd38] sm:$0xff] %v1662
        %2175 = vst [vmem:[%s198 + $0xd40] sm:$0xff] %v1663
        %2176 = vst [vmem:[%s198 + $0xd48] sm:$0xff] %v1664
        %2177 = vst [vmem:[%s198 + $0xd50] sm:$0xff] %v1665
        %2178 = vst [vmem:[%s198 + $0xd58] sm:$0xff] %v1666
        %2179 = vst [vmem:[%s198 + $0xd60] sm:$0xff] %v1667
        %2180 = vst [vmem:[%s198 + $0xd68] sm:$0xff] %v1668
        %2181 = vst [vmem:[%s198 + $0xd70] sm:$0xff] %v1669
        %2182 = vst [vmem:[%s198 + $0xd78] sm:$0xff] %v1670
        %2183 = vst [vmem:[%s198 + $0xd80] sm:$0xff] %v1671
        %2184 = vst [vmem:[%s198 + $0xd88] sm:$0xff] %v1672
        %2185 = vst [vmem:[%s198 + $0xd90] sm:$0xff] %v1673
        %2186 = vst [vmem:[%s198 + $0xd98] sm:$0xff] %v1674
        %2187 = vst [vmem:[%s198 + $0xda0] sm:$0xff] %v1675
        %2188 = vst [vmem:[%s198 + $0xda8] sm:$0xff] %v1676
        %2189 = vst [vmem:[%s198 + $0xdb0] sm:$0xff] %v1677
        %2190 = vst [vmem:[%s198 + $0xdb8] sm:$0xff] %v1678
        %2191 = vst [vmem:[%s198 + $0xdc0] sm:$0xff] %v1679
        %2192 = vst [vmem:[%s198 + $0xdc8] sm:$0xff] %v1680
        %2193 = vst [vmem:[%s198 + $0xdd0] sm:$0xff] %v1681
        %2194 = vst [vmem:[%s198 + $0xdd8] sm:$0xff] %v1682
        %2195 = vst [vmem:[%s198 + $0xde0] sm:$0xff] %v1683
        %2196 = vst [vmem:[%s198 + $0xde8] sm:$0xff] %v1684
        %2197 = vst [vmem:[%s198 + $0xdf0] sm:$0xff] %v1685
        %2198 = vst [vmem:[%s198 + $0xdf8] sm:$0xff] %v1686
        %2199 = vst [vmem:[%s198 + $0xe00] sm:$0xff] %v1687
        %2200 = vst [vmem:[%s198 + $0xe08] sm:$0xff] %v1688
        %2201 = vst [vmem:[%s198 + $0xe10] sm:$0xff] %v1689
        %2202 = vst [vmem:[%s198 + $0xe18] sm:$0xff] %v1690
        %2203 = vst [vmem:[%s198 + $0xe20] sm:$0xff] %v1691
        %2204 = vst [vmem:[%s198 + $0xe28] sm:$0xff] %v1692
        %2205 = vst [vmem:[%s198 + $0xe30] sm:$0xff] %v1693
        %2206 = vst [vmem:[%s198 + $0xe38] sm:$0xff] %v1694
        %2207 = vst [vmem:[%s198 + $0xe40] sm:$0xff] %v1695
        %2208 = vst [vmem:[%s198 + $0xe48] sm:$0xff] %v1696
        %2209 = vst [vmem:[%s198 + $0xe50] sm:$0xff] %v1697
        %2210 = vst [vmem:[%s198 + $0xe58] sm:$0xff] %v1698
        %2211 = vst [vmem:[%s198 + $0xe60] sm:$0xff] %v1699
        %2212 = vst [vmem:[%s198 + $0xe68] sm:$0xff] %v1700
        %2213 = vst [vmem:[%s198 + $0xe70] sm:$0xff] %v1701
        %2214 = vst [vmem:[%s198 + $0xe78] sm:$0xff] %v1702
        %2215 = vst [vmem:[%s198 + $0xe80] sm:$0xff] %v1703
        %2216 = vst [vmem:[%s198 + $0xe88] sm:$0xff] %v1704
        %2217 = vst [vmem:[%s198 + $0xe90] sm:$0xff] %v1705
        %2218 = vst [vmem:[%s198 + $0xe98] sm:$0xff] %v1706
        %2219 = vst [vmem:[%s198 + $0xea0] sm:$0xff] %v1707
        %2220 = vst [vmem:[%s198 + $0xea8] sm:$0xff] %v1708
        %2221 = vst [vmem:[%s198 + $0xeb0] sm:$0xff] %v1709
        %2222 = vst [vmem:[%s198 + $0xeb8] sm:$0xff] %v1710
        %2223 = vst [vmem:[%s198 + $0xec0] sm:$0xff] %v1711
        %2224 = vst [vmem:[%s198 + $0xec8] sm:$0xff] %v1712
        %2225 = vst [vmem:[%s198 + $0xed0] sm:$0xff] %v1713
        %2226 = vst [vmem:[%s198 + $0xed8] sm:$0xff] %v1714
        %2227 = vst [vmem:[%s198 + $0xee0] sm:$0xff] %v1715
        %2228 = vst [vmem:[%s198 + $0xee8] sm:$0xff] %v1716
        %2229 = vst [vmem:[%s198 + $0xef0] sm:$0xff] %v1717
        %2230 = vst [vmem:[%s198 + $0xef8] sm:$0xff] %v1718
        %2231 = vst [vmem:[%s198 + $0xf00] sm:$0xff] %v1719
        %2232 = vst [vmem:[%s198 + $0xf08] sm:$0xff] %v1720
        %2233 = vst [vmem:[%s198 + $0xf10] sm:$0xff] %v1721
        %2234 = vst [vmem:[%s198 + $0xf18] sm:$0xff] %v1722
        %2235 = vst [vmem:[%s198 + $0xf20] sm:$0xff] %v1723
        %2236 = vst [vmem:[%s198 + $0xf28] sm:$0xff] %v1724
        %2237 = vst [vmem:[%s198 + $0xf30] sm:$0xff] %v1725
        %2238 = vst [vmem:[%s198 + $0xf38] sm:$0xff] %v1726
        %2239 = vst [vmem:[%s198 + $0xf40] sm:$0xff] %v1727
        %2240 = vst [vmem:[%s198 + $0xf48] sm:$0xff] %v1728
        %2241 = vst [vmem:[%s198 + $0xf50] sm:$0xff] %v1729
        %2242 = vst [vmem:[%s198 + $0xf58] sm:$0xff] %v1730
        %2243 = vst [vmem:[%s198 + $0xf60] sm:$0xff] %v1731
        %2244 = vst [vmem:[%s198 + $0xf68] sm:$0xff] %v1732
        %2245 = vst [vmem:[%s198 + $0xf70] sm:$0xff] %v1733
        %2246 = vst [vmem:[%s198 + $0xf78] sm:$0xff] %v1734
        %2247 = vst [vmem:[%s198 + $0xf80] sm:$0xff] %v1735
        %2248 = vst [vmem:[%s198 + $0xf88] sm:$0xff] %v1736
        %2249 = vst [vmem:[%s198 + $0xf90] sm:$0xff] %v1737
        %2250 = vst [vmem:[%s198 + $0xf98] sm:$0xff] %v1738
        %2251 = vst [vmem:[%s198 + $0xfa0] sm:$0xff] %v1739
        %2252 = vst [vmem:[%s198 + $0xfa8] sm:$0xff] %v1740
        %2253 = vst [vmem:[%s198 + $0xfb0] sm:$0xff] %v1741
        %2254 = vst [vmem:[%s198 + $0xfb8] sm:$0xff] %v1742
        %2255 = vst [vmem:[%s198 + $0xfc0] sm:$0xff] %v1743
        %2256 = vst [vmem:[%s198 + $0xfc8] sm:$0xff] %v1744
        %2257 = vst [vmem:[%s198 + $0xfd0] sm:$0xff] %v1745
        %2258 = vst [vmem:[%s198 + $0xfd8] sm:$0xff] %v1746
        %2259 = vst [vmem:[%s198 + $0xfe0] sm:$0xff] %v1747
        %2260 = vst [vmem:[%s198 + $0xfe8] sm:$0xff] %v1748
        %2261 = vst [vmem:[%s198 + $0xff0] sm:$0xff] %v1749
        %2262 = vst [vmem:[%s198 + $0xff8] sm:$0xff] %v1750
        %s2263 = sand.u32 %s98, 1
        %s2264 = scalar_lea.sflag [#allocation6], %s2263
        %s2265 = sand.u32 %s98, 1
        %s2266 = smul.addr %s2265, 4096
        %s2267 = scalar_lea.vmem [#allocation7], %s2266
        // Predicated region
        $region37: #{tpu_custom_call.1} parent=31 // pred_check
          %p2268 = pneg %p108
        $region38: #{tpu_custom_call.1} parent=31 // pred_check_branch
          %2270 = sbr.rel (%p2268) target = $region40
        $region39: #{tpu_custom_call.1} parent=31 // pred_region
          %s2271 = smul.u32 64, %s22
          %s2272 = ssub.s32 159, %s2271
          %p2273 = scmp.lt.s32.totalorder %s2272, 64
          %s2274 = scalar_select %p2273, %s2272, 64
          %s2275 = smul.u32 128, %s2274
          %s2276 = smul.u32 %s2275, 8
          %s2278 = ssub.s32 65536, %s2276
          %2279 = vsyncadd %s2264, %s2278
          %p2280 = scmp.ne.s32.totalorder 0, %s2276
          %s2281 = smul.addr %s2271, 8
          %s2282 = smul.addr %s2281, 128
          %s2283 = scalar_lea.hbm %s3, %s2282
          %s2284 = smul.u32 64, %s2274
          %s2285 = sshll.u32 %s2267, 4
          %s2286 = int_to_ptr.vmem [resolvable:$true] %s2285
          %s2287 = sshll.u32 %s2284, 4
          %2291 = dma.vmem_to_hbm [thread:$0]  (%p2280), %s2286, %s2287, %s2283, %s2264, 1024, 1024, 64
        $region40: #{tpu_custom_call.1} parent=31 // pred_fallthru
          _
      $region32: #{tpu_custom_call.1} parent=5 // pred_fallthru
        _
      %p2292 = scmp.le.s32.totalorder 2, %s17
      // Predicated region
      $region41: #{tpu_custom_call.1} parent=5 // pred_check
        %p2293 = pneg %p2292
      $region42: #{tpu_custom_call.1} parent=5 // pred_check_branch
        %2295 = sbr.rel (%p2293) target = $region44
      $region43: #{tpu_custom_call.1} parent=5 // pred_region
        %s2296 = ssub.s32 %s17, 2
        // Predicated region
        $region45: #{tpu_custom_call.1} parent=43 // pred_check
          %p2297 = pneg %p114
        $region46: #{tpu_custom_call.1} parent=43 // pred_check_branch
          %2299 = sbr.rel (%p2297) target = $region48
        $region47: #{tpu_custom_call.1} parent=43 // pred_region
          %s2300 = sand.u32 %s99, 1
          %s2301 = scalar_lea.sflag [#allocation6], %s2300
          %s2302 = sand.u32 %s99, 1
          %s2303 = smul.addr %s2302, 4096
          %s2304 = scalar_lea.vmem [#allocation7], %s2303
          %2305 = dma.done %s2301, 65536
        $region48: #{tpu_custom_call.1} parent=43 // pred_fallthru
          _
      $region44: #{tpu_custom_call.1} parent=5 // pred_fallthru
        _
    $region6: #{tpu_custom_call.1} parent=1 // loop_footer
      %s21 = sadd.s32 1, %s17
    $region7: #{tpu_custom_call.1} parent=1 // loop_footer_branch
      %16 = sbr.rel target = $region3
    $region8: #{tpu_custom_call.1} parent=1 // loop_exit
      _
    %2306 = vsyncpa [#allocation5], 1
    %s2307 = scalar_lea.sflag [#allocation5], 1
    %2308 = vsyncpa %s2307, 1
    %2309 = vsyncpa [#allocation6], 1
    %s2310 = scalar_lea.sflag [#allocation6], 1
    %2311 = vsyncpa %s2310, 1

</llo_original>
